<compile_context>
chip_gen: v6e
topology: v6e:2x2x1
jax: 0.10.0
libtpu: 0.0.40
codegen_flags: <defaults>
</compile_context>

<pallas_src>
import numpy as np
import jax
import jax.numpy as jnp
from jax.experimental import pallas as pl
from jax.experimental.pallas import tpu as pltpu

_GRAY_W = (0.2989, 0.587, 0.114)    # torchvision rgb_to_grayscale weights
_LANES = 128


def _chip_budgets():
    """(per-block byte budget, scoped vmem limit) sized for this chip's VMEM."""
    try:
        cap = int(getattr(pltpu.get_tpu_info(), "vmem_capacity_bytes", 0))
    except Exception:
        cap = 0
    if cap >= 100 * 1024 * 1024:            # v5e / v6e: 128 MiB VMEM per TC
        return 6 * 1024 * 1024, 64 * 1024 * 1024
    # v7x (64 MiB per TC) or unknown: stay conservative.
    return 4 * 1024 * 1024, 36 * 1024 * 1024


def _gray(r, g, b):
    return _GRAY_W[0] * r + _GRAY_W[1] * g + _GRAY_W[2] * b


def _plane_sum(x):
    # (n_pack, rows, 128) -> (n_pack, 1, 1); lane reduce then sublane reduce (XLU slot).
    return jnp.sum(jnp.sum(x, axis=2, keepdims=True), axis=1, keepdims=True)


def _adjust_hue(r, g, b, hf):
    """torchvision adjust_hue on per-channel (n_pack, rows, 128) f32 planes in [0, 1]."""
    maxc = jnp.maximum(jnp.maximum(r, g), b)
    minc = jnp.minimum(jnp.minimum(r, g), b)
    eqc = maxc == minc
    cr = maxc - minc
    ones = jnp.ones_like(maxc)
    # EUP approx reciprocals replace the four divisions on the VALU critical path.
    inv_cr = pl.reciprocal(jnp.where(eqc, ones, cr), approx=True)
    inv_max = pl.reciprocal(jnp.where(eqc, ones, maxc), approx=True)
    s = cr * inv_max
    rc = (maxc - r) * inv_cr
    gc = (maxc - g) * inv_cr
    bc = (maxc - b) * inv_cr
    max_is_r = maxc == r
    max_is_g = maxc == g
    hraw = jnp.where(max_is_r, bc - gc,
                     jnp.where(max_is_g, 2.0 + rc - bc, 4.0 + gc - rc))
    # Fused: mod(mod(raw/6 + 1, 1) + hf, 1) == x - floor(x) with x = raw/6 + 1 + hf.
    x = hraw * (1.0 / 6.0) + (1.0 + hf)
    h = x - jnp.floor(x)
    # hsv -> rgb (v is maxc; no extra plane).
    v = maxc
    h6 = h * 6.0
    i = jnp.floor(h6)
    f = h6 - i
    i = jnp.minimum(i, 5.0)                       # safety at the h==1 rounding edge
    p = jnp.clip(v * (1.0 - s), 0.0, 1.0)
    q = jnp.clip(v * (1.0 - s * f), 0.0, 1.0)
    t = jnp.clip(v * (1.0 - s * (1.0 - f)), 0.0, 1.0)
    # Sector masks computed once, reused for all three channels.
    m0 = i == 0.0
    m1 = i == 1.0
    m2 = i == 2.0
    m3 = i == 3.0
    m4 = i == 4.0

    def sel(c0, c1, c2, c3, c4, c5):
        return jnp.where(m0, c0, jnp.where(m1, c1, jnp.where(m2, c2,
               jnp.where(m3, c3, jnp.where(m4, c4, c5)))))

    return sel(v, q, p, p, t, v), sel(t, v, v, q, p, p), sel(p, p, t, v, v, q)


def _apply_ops(op_ids, enabled, factors_ref, contrast_mean, r, g, b):
    """Apply the enabled jitter ops, in `op_ids` order, to per-channel planes."""
    for fn_id in op_ids:
        if fn_id == 0 and enabled[0]:              # brightness: blend(img, 0, f)
            bf = factors_ref[0]
            r = jnp.clip(r * bf, 0.0, 1.0)
            g = jnp.clip(g * bf, 0.0, 1.0)
            b = jnp.clip(b * bf, 0.0, 1.0)
        elif fn_id == 1 and enabled[1]:            # contrast: blend(img, mean(gray(img)), f)
            cf = factors_ref[1]
            off = (1.0 - cf) * contrast_mean        # (n_pack, 1, 1) per-image offsets
            r = jnp.clip(cf * r + off, 0.0, 1.0)
            g = jnp.clip(cf * g + off, 0.0, 1.0)
            b = jnp.clip(cf * b + off, 0.0, 1.0)
        elif fn_id == 2 and enabled[2]:            # saturation: blend(img, gray(img), f)
            sf = factors_ref[2]
            gr = (1.0 - sf) * _gray(r, g, b)
            r = jnp.clip(sf * r + gr, 0.0, 1.0)
            g = jnp.clip(sf * g + gr, 0.0, 1.0)
            b = jnp.clip(sf * b + gr, 0.0, 1.0)
        elif fn_id == 3 and enabled[3]:            # hue
            r, g, b = _adjust_hue(r, g, b, factors_ref[3])
    return r, g, b


def _make_apply_kernel(order, enabled):
    def kernel(factors_ref, mean_ref, x_ref, o_ref):
        # Direct per-channel reads: dense (n_pack, rows, 128) planes, no stacked temporary.
        r = x_ref[:, 0, :, :].astype(jnp.float32)
        g = x_ref[:, 1, :, :].astype(jnp.float32)
        b = x_ref[:, 2, :, :].astype(jnp.float32)
        cmean = mean_ref[...] if enabled[1] else None
        r, g, b = _apply_ops(order, enabled, factors_ref, cmean, r, g, b)
        # Direct per-channel stores (single unmasked vst stream per channel).
        o_ref[:, 0, :, :] = r.astype(o_ref.dtype)
        o_ref[:, 1, :, :] = g.astype(o_ref.dtype)
        o_ref[:, 2, :, :] = b.astype(o_ref.dtype)
    return kernel


def _make_sum_kernel(pre_ops, enabled):
    # Contrast pre-pass: apply the ops preceding contrast, accumulate per-image gray sums.
    def kernel(factors_ref, x_ref, sum_ref):
        r = x_ref[:, 0, :, :].astype(jnp.float32)
        g = x_ref[:, 1, :, :].astype(jnp.float32)
        b = x_ref[:, 2, :, :].astype(jnp.float32)
        r, g, b = _apply_ops(pre_ops, enabled, factors_ref, None, r, g, b)
        # Per-channel reductions combined with scalar gray weights (no gray plane).
        tile_sum = (_GRAY_W[0] * _plane_sum(r)
                    + _GRAY_W[1] * _plane_sum(g)
                    + _GRAY_W[2] * _plane_sum(b))

        @pl.when(pl.program_id(1) == 0)
        def _():
            sum_ref[...] = jnp.zeros_like(sum_ref)

        sum_ref[...] += tile_sum
    return kernel


def _choose_tiling(N, P, budget_bytes):
    """Pick (n_pack, r_tile rows of 128 lanes, padded row count R_pad)."""
    bytes_per_row = 3 * 4 * _LANES                     # 3 channels, f32 compute width
    max_rows = max(8, (budget_bytes // bytes_per_row) // 8 * 8)
    R0 = -(-P // _LANES)                               # cdiv(P, 128)
    if R0 <= max_rows:
        # Whole image fits one block: pack several images per block if small.
        r_tile, R_pad = R0, R0
        max_pack = max(1, max_rows // max(R0, 1))
        if N >= 2:
            max_pack = min(max_pack, N // 2)           # keep >=2 grid steps (v7x: 2 TCs)
        n_pack = 1
        for d in range(min(N, max_pack), 0, -1):
            if N % d == 0:
                n_pack = d
                break
    else:
        n_pack = 1
        r_tile = 0
        # Prefer an exact divisor of R0 (multiple of 8) to avoid a padding copy in HBM.
        for d in range(max_rows, 7, -8):
            if R0 % d == 0:
                r_tile = d
                break
        if r_tile >= 64:
            R_pad = R0
        else:
            r_tile = max_rows
            R_pad = -(-R0 // r_tile) * r_tile
    return n_pack, r_tile, R_pad


_FN_CACHE = {}


def _build_jitter_fn(order, enabled, N, H, W, dtype):
    budget, vmem_limit = _chip_budgets()
    P = H * W
    n_pack, r_tile, R_pad = _choose_tiling(N, P, budget)
    P_pad = R_pad * _LANES
    grid = (N // n_pack, R_pad // r_tile)

    img_spec = pl.BlockSpec((n_pack, 3, r_tile, _LANES), lambda b, p: (b, 0, p, 0))
    mean_spec = pl.BlockSpec((n_pack, 1, 1), lambda b, p: (b, 0, 0))
    smem_spec = pl.BlockSpec(memory_space=pltpu.MemorySpace.SMEM)

    apply_call = pl.pallas_call(
        _make_apply_kernel(order, enabled),
        out_shape=jax.ShapeDtypeStruct((N, 3, R_pad, _LANES), dtype),
        grid_spec=pl.GridSpec(
            grid=grid,
            in_specs=[smem_spec, mean_spec, img_spec],
            out_specs=img_spec),
        compiler_params=pltpu.CompilerParams(
            dimension_semantics=("parallel", "parallel"),
            vmem_limit_bytes=vmem_limit),
    )

    need_mean = enabled[1]
    sum_call = None
    if need_mean:
        pre_ops = []
        for fn_id in order:
            if fn_id == 1:
                break
            pre_ops.append(fn_id)
        sum_call = pl.pallas_call(
            _make_sum_kernel(tuple(pre_ops), enabled),
            out_shape=jax.ShapeDtypeStruct((N, 1, 1), jnp.float32),
            grid_spec=pl.GridSpec(
                grid=grid,
                in_specs=[smem_spec, img_spec],
                out_specs=mean_spec),              # same block across pixel axis => accumulator
            compiler_params=pltpu.CompilerParams(
                dimension_semantics=("parallel", "arbitrary"),
                vmem_limit_bytes=vmem_limit),
        )

    inv_hw = np.float32(1.0 / P)                   # padded pixels are zero -> sum unaffected

    def fn(x, factors):
        xr = x.reshape(N, 3, P)
        if P_pad != P:
            xr = jnp.pad(xr, ((0, 0), (0, 0), (0, P_pad - P)))
        xr = xr.reshape(N, 3, R_pad, _LANES)
        if need_mean:
            means = sum_call(factors, xr) * inv_hw       # (N, 1, 1) per-image gray means
        else:
            means = jnp.zeros((N, 1, 1), jnp.float32)
        out = apply_call(factors, means, xr)
        out = out.reshape(N, 3, P_pad)
        if P_pad != P:
            out = out[:, :, :P]
        return out.reshape(N, 3, H, W)

    return jax.jit(fn)


def _get_jitter_fn(order, enabled, N, H, W, dtype):
    key = (order, enabled, N, H, W, np.dtype(dtype).name)
    fn = _FN_CACHE.get(key)
    if fn is None:
        fn = _build_jitter_fn(order, enabled, N, H, W, dtype)
        _FN_CACHE[key] = fn
    return fn


class ColorJitterPallas:
    """JAX/Pallas port of ColorJitter (brightness / contrast / saturation / hue)."""

    def __init__(self, brightness=0, contrast=0, saturation=0, hue=0, seed=0):
        self.brightness = self._check_input(brightness, "brightness")
        self.contrast = self._check_input(contrast, "contrast")
        self.saturation = self._check_input(saturation, "saturation")
        self.hue = self._check_input(hue, "hue", center=0, bound=(-0.5, 0.5),
                                     clip_first_on_zero=False)
        self._rng = np.random.RandomState(seed)   # deterministic host RNG

    @staticmethod
    def _check_input(value, name, center=1, bound=(0, float("inf")),
                     clip_first_on_zero=True):
        if isinstance(value, (int, float)):
            if value < 0:
                raise ValueError(f"If {name} is a single number, it must be non negative.")
            value = [center - float(value), center + float(value)]
            if clip_first_on_zero:
                value[0] = max(value[0], 0.0)
        elif isinstance(value, (tuple, list)) and len(value) == 2:
            if not bound[0] <= value[0] <= value[1] <= bound[1]:
                raise ValueError(f"{name} values should be between {bound}")
        else:
            raise TypeError(f"{name} should be a single number or a list/tuple with length 2.")
        if value[0] == value[1] == center:
            value = None
        return value

    def get_params(self):
        # Host-side equivalent of torch.randperm / torch.empty(1).uniform_()
        fn_idx = self._rng.permutation(4)
        b = None if self.brightness is None else float(self._rng.uniform(*self.brightness))
        c = None if self.contrast is None else float(self._rng.uniform(*self.contrast))
        s = None if self.saturation is None else float(self._rng.uniform(*self.saturation))
        h = None if self.hue is None else float(self._rng.uniform(*self.hue))
        return fn_idx, b, c, s, h

    def __call__(self, imgs, targets=None):
        # imgs: (N, 3, H, W), floating in [0, 1] (output keeps the input dtype)
        fn_idx, b, c, s, h = self.get_params()
        order = tuple(int(i) for i in fn_idx)
        enabled = (b is not None, c is not None, s is not None, h is not None)
        factors = jnp.array(
            [b if b is not None else 1.0,
             c if c is not None else 1.0,
             s if s is not None else 1.0,
             h if h is not None else 0.0], dtype=jnp.float32)

        N, C, H, W = imgs.shape
        assert C == 3, "ColorJitter kernel expects RGB (C == 3)"
        x = imgs
        if not jnp.issubdtype(x.dtype, jnp.floating):
            # TODO(synk): torchvision's uint8 integer rounding path is not reproduced;
            # non-float inputs are promoted to float32.
            x = x.astype(jnp.float32)

        fn = _get_jitter_fn(order, enabled, N, H, W, x.dtype)
        out = fn(x, factors)

        if targets is not None:
            return out, targets
        return out


if __name__ == "__main__":
    key = jax.random.PRNGKey(0)
    # small video-like batch: 2 frames, RGB, 16x16, values in [0, 1)
    x = jax.random.uniform(key, (2, 3, 16, 16), dtype=jnp.float32)

    jitter = ColorJitterPallas(brightness=0.4, contrast=0.4, saturation=0.4, hue=0.1, seed=0)
    y = jax.block_until_ready(jitter(x))

    assert y.shape == x.shape and y.dtype == x.dtype
    assert bool(jnp.all(jnp.isfinite(y)))
    assert bool(jnp.all((y >= 0.0) & (y <= 1.0)))

    print("KERNEL_OK")
</pallas_src>

<mosaic_0001>
module attributes {stable_mosaic.version = 11 : i64} {
  func.func @kernel(%arg0: i32, %arg1: i32, %arg2: memref<4xf32, #tpu.memory_space<smem>>, %arg3: memref<1x3x2x128xf32, #tpu.memory_space<vmem>>, %arg4: memref<1x1x1xf32, #tpu.memory_space<vmem>>) attributes {dimension_semantics = [#tpu.dimension_semantics<parallel>, #tpu.dimension_semantics<arbitrary>], iteration_bounds = array<i64: 2, 1>, scalar_prefetch = 0 : i64, scratch_operands = 0 : i64, tpu.core_type = #tpu.core_type<tc>, window_params = [{transform_indices = @transform_0, window_bounds = array<i64: 4>}, {transform_indices = @transform_1, window_bounds = array<i64: 1, 3, 2, 128>}, {transform_indices = @transform_2, window_bounds = array<i64: 1, 1, 1>}]} {
    %c0 = arith.constant 0 : index
    %c0_0 = arith.constant 0 : index
    %c0_1 = arith.constant 0 : index
    %c0_2 = arith.constant 0 : index
    %0 = vector.load %arg3[%c0, %c0_0, %c0_1, %c0_2] : memref<1x3x2x128xf32, #tpu.memory_space<vmem>>, vector<1x1x2x128xf32>
    %1 = vector.shape_cast %0 : vector<1x1x2x128xf32> to vector<1x2x128xf32>
    %c0_3 = arith.constant 0 : index
    %c1 = arith.constant 1 : index
    %c0_4 = arith.constant 0 : index
    %c0_5 = arith.constant 0 : index
    %2 = vector.load %arg3[%c0_3, %c1, %c0_4, %c0_5] : memref<1x3x2x128xf32, #tpu.memory_space<vmem>>, vector<1x1x2x128xf32>
    %3 = vector.shape_cast %2 : vector<1x1x2x128xf32> to vector<1x2x128xf32>
    %c0_6 = arith.constant 0 : index
    %c2 = arith.constant 2 : index
    %c0_7 = arith.constant 0 : index
    %c0_8 = arith.constant 0 : index
    %4 = vector.load %arg3[%c0_6, %c2, %c0_7, %c0_8] : memref<1x3x2x128xf32, #tpu.memory_space<vmem>>, vector<1x1x2x128xf32>
    %5 = vector.shape_cast %4 : vector<1x1x2x128xf32> to vector<1x2x128xf32>
    %c2_9 = arith.constant 2 : index
    %6 = memref.load %arg2[%c2_9] : memref<4xf32, #tpu.memory_space<smem>>
    %cst = arith.constant 1.000000e+00 : f32
    %7 = arith.subf %cst, %6 : f32
    %cst_10 = arith.constant 2.989000e-01 : f32
    %8 = vector.broadcast %cst_10 : f32 to vector<1x2x128xf32>
    %9 = arith.mulf %8, %1 : vector<1x2x128xf32>
    %cst_11 = arith.constant 5.870000e-01 : f32
    %10 = vector.broadcast %cst_11 : f32 to vector<1x2x128xf32>
    %11 = arith.mulf %10, %3 : vector<1x2x128xf32>
    %12 = arith.addf %9, %11 : vector<1x2x128xf32>
    %cst_12 = arith.constant 1.140000e-01 : f32
    %13 = vector.broadcast %cst_12 : f32 to vector<1x2x128xf32>
    %14 = arith.mulf %13, %5 : vector<1x2x128xf32>
    %15 = arith.addf %12, %14 : vector<1x2x128xf32>
    %16 = vector.broadcast %7 : f32 to vector<1x2x128xf32>
    %17 = arith.mulf %16, %15 : vector<1x2x128xf32>
    %18 = vector.broadcast %6 : f32 to vector<1x2x128xf32>
    %19 = arith.mulf %18, %1 : vector<1x2x128xf32>
    %20 = arith.addf %19, %17 : vector<1x2x128xf32>
    %cst_13 = arith.constant 0.000000e+00 : f32
    %cst_14 = arith.constant 1.000000e+00 : f32
    %21 = vector.broadcast %cst_13 : f32 to vector<1x2x128xf32>
    %22 = arith.maximumf %21, %20 : vector<1x2x128xf32>
    %23 = vector.broadcast %cst_14 : f32 to vector<1x2x128xf32>
    %24 = arith.minimumf %23, %22 : vector<1x2x128xf32>
    %25 = vector.broadcast %6 : f32 to vector<1x2x128xf32>
    %26 = arith.mulf %25, %3 : vector<1x2x128xf32>
    %27 = arith.addf %26, %17 : vector<1x2x128xf32>
    %cst_15 = arith.constant 0.000000e+00 : f32
    %cst_16 = arith.constant 1.000000e+00 : f32
    %28 = vector.broadcast %cst_15 : f32 to vector<1x2x128xf32>
    %29 = arith.maximumf %28, %27 : vector<1x2x128xf32>
    %30 = vector.broadcast %cst_16 : f32 to vector<1x2x128xf32>
    %31 = arith.minimumf %30, %29 : vector<1x2x128xf32>
    %32 = vector.broadcast %6 : f32 to vector<1x2x128xf32>
    %33 = arith.mulf %32, %5 : vector<1x2x128xf32>
    %34 = arith.addf %33, %17 : vector<1x2x128xf32>
    %cst_17 = arith.constant 0.000000e+00 : f32
    %cst_18 = arith.constant 1.000000e+00 : f32
    %35 = vector.broadcast %cst_17 : f32 to vector<1x2x128xf32>
    %36 = arith.maximumf %35, %34 : vector<1x2x128xf32>
    %37 = vector.broadcast %cst_18 : f32 to vector<1x2x128xf32>
    %38 = arith.minimumf %37, %36 : vector<1x2x128xf32>
    %c3 = arith.constant 3 : index
    %39 = memref.load %arg2[%c3] : memref<4xf32, #tpu.memory_space<smem>>
    %40 = arith.maximumf %24, %31 : vector<1x2x128xf32>
    %41 = arith.maximumf %40, %38 : vector<1x2x128xf32>
    %42 = arith.minimumf %24, %31 : vector<1x2x128xf32>
    %43 = arith.minimumf %42, %38 : vector<1x2x128xf32>
    %44 = arith.cmpf oeq, %41, %43 : vector<1x2x128xf32>
    %45 = arith.subf %41, %43 : vector<1x2x128xf32>
    %cst_19 = arith.constant 1.000000e+00 : f32
    %46 = vector.broadcast %cst_19 : f32 to vector<1x2x128xf32>
    %47 = arith.select %44, %46, %45 : vector<1x2x128xi1>, vector<1x2x128xf32>
    %48 = tpu.reciprocal %47 {approx = true} : vector<1x2x128xf32> -> vector<1x2x128xf32>
    %49 = arith.select %44, %46, %41 : vector<1x2x128xi1>, vector<1x2x128xf32>
    %50 = tpu.reciprocal %49 {approx = true} : vector<1x2x128xf32> -> vector<1x2x128xf32>
    %51 = arith.mulf %45, %50 : vector<1x2x128xf32>
    %52 = arith.subf %41, %24 : vector<1x2x128xf32>
    %53 = arith.mulf %52, %48 : vector<1x2x128xf32>
    %54 = arith.subf %41, %31 : vector<1x2x128xf32>
    %55 = arith.mulf %54, %48 : vector<1x2x128xf32>
    %56 = arith.subf %41, %38 : vector<1x2x128xf32>
    %57 = arith.mulf %56, %48 : vector<1x2x128xf32>
    %58 = arith.cmpf oeq, %41, %24 : vector<1x2x128xf32>
    %59 = arith.cmpf oeq, %41, %31 : vector<1x2x128xf32>
    %60 = arith.subf %57, %55 : vector<1x2x128xf32>
    %cst_20 = arith.constant 2.000000e+00 : f32
    %61 = vector.broadcast %cst_20 : f32 to vector<1x2x128xf32>
    %62 = arith.addf %61, %53 : vector<1x2x128xf32>
    %63 = arith.subf %62, %57 : vector<1x2x128xf32>
    %cst_21 = arith.constant 4.000000e+00 : f32
    %64 = vector.broadcast %cst_21 : f32 to vector<1x2x128xf32>
    %65 = arith.addf %64, %55 : vector<1x2x128xf32>
    %66 = arith.subf %65, %53 : vector<1x2x128xf32>
    %67 = arith.select %59, %63, %66 : vector<1x2x128xi1>, vector<1x2x128xf32>
    %68 = arith.select %58, %60, %67 : vector<1x2x128xi1>, vector<1x2x128xf32>
    %cst_22 = arith.constant 0.166666672 : f32
    %69 = vector.broadcast %cst_22 : f32 to vector<1x2x128xf32>
    %70 = arith.mulf %68, %69 : vector<1x2x128xf32>
    %cst_23 = arith.constant 1.000000e+00 : f32
    %71 = arith.addf %cst_23, %39 : f32
    %72 = vector.broadcast %71 : f32 to vector<1x2x128xf32>
    %73 = arith.addf %70, %72 : vector<1x2x128xf32>
    %74 = math.floor %73 : vector<1x2x128xf32>
    %75 = arith.subf %73, %74 : vector<1x2x128xf32>
    %cst_24 = arith.constant 6.000000e+00 : f32
    %76 = vector.broadcast %cst_24 : f32 to vector<1x2x128xf32>
    %77 = arith.mulf %75, %76 : vector<1x2x128xf32>
    %78 = math.floor %77 : vector<1x2x128xf32>
    %79 = arith.subf %77, %78 : vector<1x2x128xf32>
    %cst_25 = arith.constant 5.000000e+00 : f32
    %80 = vector.broadcast %cst_25 : f32 to vector<1x2x128xf32>
    %81 = arith.minimumf %78, %80 : vector<1x2x128xf32>
    %cst_26 = arith.constant 1.000000e+00 : f32
    %82 = vector.broadcast %cst_26 : f32 to vector<1x2x128xf32>
    %83 = arith.subf %82, %51 : vector<1x2x128xf32>
    %84 = arith.mulf %41, %83 : vector<1x2x128xf32>
    %cst_27 = arith.constant 0.000000e+00 : f32
    %cst_28 = arith.constant 1.000000e+00 : f32
    %85 = vector.broadcast %cst_27 : f32 to vector<1x2x128xf32>
    %86 = arith.maximumf %85, %84 : vector<1x2x128xf32>
    %87 = vector.broadcast %cst_28 : f32 to vector<1x2x128xf32>
    %88 = arith.minimumf %87, %86 : vector<1x2x128xf32>
    %89 = arith.mulf %51, %79 : vector<1x2x128xf32>
    %cst_29 = arith.constant 1.000000e+00 : f32
    %90 = vector.broadcast %cst_29 : f32 to vector<1x2x128xf32>
    %91 = arith.subf %90, %89 : vector<1x2x128xf32>
    %92 = arith.mulf %41, %91 : vector<1x2x128xf32>
    %cst_30 = arith.constant 0.000000e+00 : f32
    %cst_31 = arith.constant 1.000000e+00 : f32
    %93 = vector.broadcast %cst_30 : f32 to vector<1x2x128xf32>
    %94 = arith.maximumf %93, %92 : vector<1x2x128xf32>
    %95 = vector.broadcast %cst_31 : f32 to vector<1x2x128xf32>
    %96 = arith.minimumf %95, %94 : vector<1x2x128xf32>
    %cst_32 = arith.constant 1.000000e+00 : f32
    %97 = vector.broadcast %cst_32 : f32 to vector<1x2x128xf32>
    %98 = arith.subf %97, %79 : vector<1x2x128xf32>
    %99 = arith.mulf %51, %98 : vector<1x2x128xf32>
    %cst_33 = arith.constant 1.000000e+00 : f32
    %100 = vector.broadcast %cst_33 : f32 to vector<1x2x128xf32>
    %101 = arith.subf %100, %99 : vector<1x2x128xf32>
    %102 = arith.mulf %41, %101 : vector<1x2x128xf32>
    %cst_34 = arith.constant 0.000000e+00 : f32
    %cst_35 = arith.constant 1.000000e+00 : f32
    %103 = vector.broadcast %cst_34 : f32 to vector<1x2x128xf32>
    %104 = arith.maximumf %103, %102 : vector<1x2x128xf32>
    %105 = vector.broadcast %cst_35 : f32 to vector<1x2x128xf32>
    %106 = arith.minimumf %105, %104 : vector<1x2x128xf32>
    %cst_36 = arith.constant 0.000000e+00 : f32
    %107 = vector.broadcast %cst_36 : f32 to vector<1x2x128xf32>
    %108 = arith.cmpf oeq, %81, %107 : vector<1x2x128xf32>
    %cst_37 = arith.constant 1.000000e+00 : f32
    %109 = vector.broadcast %cst_37 : f32 to vector<1x2x128xf32>
    %110 = arith.cmpf oeq, %81, %109 : vector<1x2x128xf32>
    %cst_38 = arith.constant 2.000000e+00 : f32
    %111 = vector.broadcast %cst_38 : f32 to vector<1x2x128xf32>
    %112 = arith.cmpf oeq, %81, %111 : vector<1x2x128xf32>
    %cst_39 = arith.constant 3.000000e+00 : f32
    %113 = vector.broadcast %cst_39 : f32 to vector<1x2x128xf32>
    %114 = arith.cmpf oeq, %81, %113 : vector<1x2x128xf32>
    %cst_40 = arith.constant 4.000000e+00 : f32
    %115 = vector.broadcast %cst_40 : f32 to vector<1x2x128xf32>
    %116 = arith.cmpf oeq, %81, %115 : vector<1x2x128xf32>
    %117 = arith.select %116, %106, %41 : vector<1x2x128xi1>, vector<1x2x128xf32>
    %118 = arith.select %114, %88, %117 : vector<1x2x128xi1>, vector<1x2x128xf32>
    %119 = arith.select %112, %88, %118 : vector<1x2x128xi1>, vector<1x2x128xf32>
    %120 = arith.select %110, %96, %119 : vector<1x2x128xi1>, vector<1x2x128xf32>
    %121 = arith.select %108, %41, %120 : vector<1x2x128xi1>, vector<1x2x128xf32>
    %122 = arith.select %116, %88, %88 : vector<1x2x128xi1>, vector<1x2x128xf32>
    %123 = arith.select %114, %96, %122 : vector<1x2x128xi1>, vector<1x2x128xf32>
    %124 = arith.select %112, %41, %123 : vector<1x2x128xi1>, vector<1x2x128xf32>
    %125 = arith.select %110, %41, %124 : vector<1x2x128xi1>, vector<1x2x128xf32>
    %126 = arith.select %108, %106, %125 : vector<1x2x128xi1>, vector<1x2x128xf32>
    %127 = arith.select %116, %41, %96 : vector<1x2x128xi1>, vector<1x2x128xf32>
    %128 = arith.select %114, %41, %127 : vector<1x2x128xi1>, vector<1x2x128xf32>
    %129 = arith.select %112, %106, %128 : vector<1x2x128xi1>, vector<1x2x128xf32>
    %130 = arith.select %110, %88, %129 : vector<1x2x128xi1>, vector<1x2x128xf32>
    %131 = arith.select %108, %88, %130 : vector<1x2x128xi1>, vector<1x2x128xf32>
    %cst_41 = arith.constant dense<0.000000e+00> : vector<1x2xf32>
    %132 = vector.multi_reduction <add>, %121, %cst_41 [2] : vector<1x2x128xf32> to vector<1x2xf32>
    %133 = vector.shape_cast %132 : vector<1x2xf32> to vector<1x2x1xf32>
    %cst_42 = arith.constant dense<0.000000e+00> : vector<1x1xf32>
    %134 = vector.multi_reduction <add>, %133, %cst_42 [1] : vector<1x2x1xf32> to vector<1x1xf32>
    %135 = vector.shape_cast %134 : vector<1x1xf32> to vector<1x1x1xf32>
    %cst_43 = arith.constant 2.989000e-01 : f32
    %136 = vector.broadcast %cst_43 : f32 to vector<1x1x1xf32>
    %137 = arith.mulf %136, %135 : vector<1x1x1xf32>
    %cst_44 = arith.constant dense<0.000000e+00> : vector<1x2xf32>
    %138 = vector.multi_reduction <add>, %126, %cst_44 [2] : vector<1x2x128xf32> to vector<1x2xf32>
    %139 = vector.shape_cast %138 : vector<1x2xf32> to vector<1x2x1xf32>
    %cst_45 = arith.constant dense<0.000000e+00> : vector<1x1xf32>
    %140 = vector.multi_reduction <add>, %139, %cst_45 [1] : vector<1x2x1xf32> to vector<1x1xf32>
    %141 = vector.shape_cast %140 : vector<1x1xf32> to vector<1x1x1xf32>
    %cst_46 = arith.constant 5.870000e-01 : f32
    %142 = vector.broadcast %cst_46 : f32 to vector<1x1x1xf32>
    %143 = arith.mulf %142, %141 : vector<1x1x1xf32>
    %144 = arith.addf %137, %143 : vector<1x1x1xf32>
    %cst_47 = arith.constant dense<0.000000e+00> : vector<1x2xf32>
    %145 = vector.multi_reduction <add>, %131, %cst_47 [2] : vector<1x2x128xf32> to vector<1x2xf32>
    %146 = vector.shape_cast %145 : vector<1x2xf32> to vector<1x2x1xf32>
    %cst_48 = arith.constant dense<0.000000e+00> : vector<1x1xf32>
    %147 = vector.multi_reduction <add>, %146, %cst_48 [1] : vector<1x2x1xf32> to vector<1x1xf32>
    %148 = vector.shape_cast %147 : vector<1x1xf32> to vector<1x1x1xf32>
    %cst_49 = arith.constant 1.140000e-01 : f32
    %149 = vector.broadcast %cst_49 : f32 to vector<1x1x1xf32>
    %150 = arith.mulf %149, %148 : vector<1x1x1xf32>
    %151 = arith.addf %144, %150 : vector<1x1x1xf32>
    %c0_i32 = arith.constant 0 : i32
    %152 = arith.cmpi eq, %arg1, %c0_i32 : i32
    %153 = arith.extui %152 : i1 to i32
    %c0_i32_50 = arith.constant 0 : i32
    %154 = arith.cmpi ne, %153, %c0_i32_50 : i32
    scf.if %154 {
      %cst_57 = arith.constant 0.000000e+00 : f32
      %158 = vector.broadcast %cst_57 : f32 to vector<1x1x1xf32>
      %c0_58 = arith.constant 0 : index
      %c0_59 = arith.constant 0 : index
      %c0_60 = arith.constant 0 : index
      %159 = vector.load %arg4[%c0_58, %c0_59, %c0_60] : memref<1x1x1xf32, #tpu.memory_space<vmem>>, vector<1x1x1xf32>
      tpu.vector_store %arg4[%c0_58, %c0_59, %c0_60], %158 {strides = array<i32>} : memref<1x1x1xf32, #tpu.memory_space<vmem>>, vector<1x1x1xf32>,
    } else {
    }
    %c0_51 = arith.constant 0 : index
    %c0_52 = arith.constant 0 : index
    %c0_53 = arith.constant 0 : index
    %155 = vector.load %arg4[%c0_51, %c0_52, %c0_53] : memref<1x1x1xf32, #tpu.memory_space<vmem>>, vector<1x1x1xf32>
    %156 = arith.addf %155, %151 : vector<1x1x1xf32>
    %c0_54 = arith.constant 0 : index
    %c0_55 = arith.constant 0 : index
    %c0_56 = arith.constant 0 : index
    %157 = vector.load %arg4[%c0_54, %c0_55, %c0_56] : memref<1x1x1xf32, #tpu.memory_space<vmem>>, vector<1x1x1xf32>
    tpu.vector_store %arg4[%c0_54, %c0_55, %c0_56], %156 {strides = array<i32>} : memref<1x1x1xf32, #tpu.memory_space<vmem>>, vector<1x1x1xf32>,
    return
  }
  func.func @transform_0(%arg0: i32, %arg1: i32) -> i32 {
    %c0_i32 = arith.constant 0 : i32
    %c0_i32_0 = arith.constant 0 : i32
    return %c0_i32 : i32
  }
  func.func @transform_1(%arg0: i32, %arg1: i32) -> (i32, i32, i32, i32) {
    %c0_i32 = arith.constant 0 : i32
    %c0_i32_0 = arith.constant 0 : i32
    %c0_i32_1 = arith.constant 0 : i32
    return %arg0, %c0_i32, %arg1, %c0_i32_0 : i32, i32, i32, i32
  }
  func.func @transform_2(%arg0: i32, %arg1: i32) -> (i32, i32, i32) {
    %c0_i32 = arith.constant 0 : i32
    %c0_i32_0 = arith.constant 0 : i32
    %c0_i32_1 = arith.constant 0 : i32
    return %arg0, %c0_i32, %c0_i32_0 : i32, i32, i32
  }
}

module attributes {stable_mosaic.version = 11 : i64} {
  func.func @kernel(%arg0: i32, %arg1: i32, %arg2: memref<4xf32, #tpu.memory_space<smem>>, %arg3: memref<1x1x1xf32, #tpu.memory_space<vmem>>, %arg4: memref<1x3x2x128xf32, #tpu.memory_space<vmem>>, %arg5: memref<1x3x2x128xf32, #tpu.memory_space<vmem>>) attributes {dimension_semantics = [#tpu.dimension_semantics<parallel>, #tpu.dimension_semantics<parallel>], iteration_bounds = array<i64: 2, 1>, scalar_prefetch = 0 : i64, scratch_operands = 0 : i64, tpu.core_type = #tpu.core_type<tc>, window_params = [{transform_indices = @transform_0, window_bounds = array<i64: 4>}, {transform_indices = @transform_1, window_bounds = array<i64: 1, 1, 1>}, {transform_indices = @transform_2, window_bounds = array<i64: 1, 3, 2, 128>}, {transform_indices = @transform_3, window_bounds = array<i64: 1, 3, 2, 128>}]} {
    %c0 = arith.constant 0 : index
    %c0_0 = arith.constant 0 : index
    %c0_1 = arith.constant 0 : index
    %c0_2 = arith.constant 0 : index
    %0 = vector.load %arg4[%c0, %c0_0, %c0_1, %c0_2] : memref<1x3x2x128xf32, #tpu.memory_space<vmem>>, vector<1x1x2x128xf32>
    %1 = vector.shape_cast %0 : vector<1x1x2x128xf32> to vector<1x2x128xf32>
    %c0_3 = arith.constant 0 : index
    %c1 = arith.constant 1 : index
    %c0_4 = arith.constant 0 : index
    %c0_5 = arith.constant 0 : index
    %2 = vector.load %arg4[%c0_3, %c1, %c0_4, %c0_5] : memref<1x3x2x128xf32, #tpu.memory_space<vmem>>, vector<1x1x2x128xf32>
    %3 = vector.shape_cast %2 : vector<1x1x2x128xf32> to vector<1x2x128xf32>
    %c0_6 = arith.constant 0 : index
    %c2 = arith.constant 2 : index
    %c0_7 = arith.constant 0 : index
    %c0_8 = arith.constant 0 : index
    %4 = vector.load %arg4[%c0_6, %c2, %c0_7, %c0_8] : memref<1x3x2x128xf32, #tpu.memory_space<vmem>>, vector<1x1x2x128xf32>
    %5 = vector.shape_cast %4 : vector<1x1x2x128xf32> to vector<1x2x128xf32>
    %c0_9 = arith.constant 0 : index
    %c0_10 = arith.constant 0 : index
    %c0_11 = arith.constant 0 : index
    %6 = vector.load %arg3[%c0_9, %c0_10, %c0_11] : memref<1x1x1xf32, #tpu.memory_space<vmem>>, vector<1x1x1xf32>
    %c2_12 = arith.constant 2 : index
    %7 = memref.load %arg2[%c2_12] : memref<4xf32, #tpu.memory_space<smem>>
    %cst = arith.constant 1.000000e+00 : f32
    %8 = arith.subf %cst, %7 : f32
    %cst_13 = arith.constant 2.989000e-01 : f32
    %9 = vector.broadcast %cst_13 : f32 to vector<1x2x128xf32>
    %10 = arith.mulf %9, %1 : vector<1x2x128xf32>
    %cst_14 = arith.constant 5.870000e-01 : f32
    %11 = vector.broadcast %cst_14 : f32 to vector<1x2x128xf32>
    %12 = arith.mulf %11, %3 : vector<1x2x128xf32>
    %13 = arith.addf %10, %12 : vector<1x2x128xf32>
    %cst_15 = arith.constant 1.140000e-01 : f32
    %14 = vector.broadcast %cst_15 : f32 to vector<1x2x128xf32>
    %15 = arith.mulf %14, %5 : vector<1x2x128xf32>
    %16 = arith.addf %13, %15 : vector<1x2x128xf32>
    %17 = vector.broadcast %8 : f32 to vector<1x2x128xf32>
    %18 = arith.mulf %17, %16 : vector<1x2x128xf32>
    %19 = vector.broadcast %7 : f32 to vector<1x2x128xf32>
    %20 = arith.mulf %19, %1 : vector<1x2x128xf32>
    %21 = arith.addf %20, %18 : vector<1x2x128xf32>
    %cst_16 = arith.constant 0.000000e+00 : f32
    %cst_17 = arith.constant 1.000000e+00 : f32
    %22 = vector.broadcast %cst_16 : f32 to vector<1x2x128xf32>
    %23 = arith.maximumf %22, %21 : vector<1x2x128xf32>
    %24 = vector.broadcast %cst_17 : f32 to vector<1x2x128xf32>
    %25 = arith.minimumf %24, %23 : vector<1x2x128xf32>
    %26 = vector.broadcast %7 : f32 to vector<1x2x128xf32>
    %27 = arith.mulf %26, %3 : vector<1x2x128xf32>
    %28 = arith.addf %27, %18 : vector<1x2x128xf32>
    %cst_18 = arith.constant 0.000000e+00 : f32
    %cst_19 = arith.constant 1.000000e+00 : f32
    %29 = vector.broadcast %cst_18 : f32 to vector<1x2x128xf32>
    %30 = arith.maximumf %29, %28 : vector<1x2x128xf32>
    %31 = vector.broadcast %cst_19 : f32 to vector<1x2x128xf32>
    %32 = arith.minimumf %31, %30 : vector<1x2x128xf32>
    %33 = vector.broadcast %7 : f32 to vector<1x2x128xf32>
    %34 = arith.mulf %33, %5 : vector<1x2x128xf32>
    %35 = arith.addf %34, %18 : vector<1x2x128xf32>
    %cst_20 = arith.constant 0.000000e+00 : f32
    %cst_21 = arith.constant 1.000000e+00 : f32
    %36 = vector.broadcast %cst_20 : f32 to vector<1x2x128xf32>
    %37 = arith.maximumf %36, %35 : vector<1x2x128xf32>
    %38 = vector.broadcast %cst_21 : f32 to vector<1x2x128xf32>
    %39 = arith.minimumf %38, %37 : vector<1x2x128xf32>
    %c3 = arith.constant 3 : index
    %40 = memref.load %arg2[%c3] : memref<4xf32, #tpu.memory_space<smem>>
    %41 = arith.maximumf %25, %32 : vector<1x2x128xf32>
    %42 = arith.maximumf %41, %39 : vector<1x2x128xf32>
    %43 = arith.minimumf %25, %32 : vector<1x2x128xf32>
    %44 = arith.minimumf %43, %39 : vector<1x2x128xf32>
    %45 = arith.cmpf oeq, %42, %44 : vector<1x2x128xf32>
    %46 = arith.subf %42, %44 : vector<1x2x128xf32>
    %cst_22 = arith.constant 1.000000e+00 : f32
    %47 = vector.broadcast %cst_22 : f32 to vector<1x2x128xf32>
    %48 = arith.select %45, %47, %46 : vector<1x2x128xi1>, vector<1x2x128xf32>
    %49 = tpu.reciprocal %48 {approx = true} : vector<1x2x128xf32> -> vector<1x2x128xf32>
    %50 = arith.select %45, %47, %42 : vector<1x2x128xi1>, vector<1x2x128xf32>
    %51 = tpu.reciprocal %50 {approx = true} : vector<1x2x128xf32> -> vector<1x2x128xf32>
    %52 = arith.mulf %46, %51 : vector<1x2x128xf32>
    %53 = arith.subf %42, %25 : vector<1x2x128xf32>
    %54 = arith.mulf %53, %49 : vector<1x2x128xf32>
    %55 = arith.subf %42, %32 : vector<1x2x128xf32>
    %56 = arith.mulf %55, %49 : vector<1x2x128xf32>
    %57 = arith.subf %42, %39 : vector<1x2x128xf32>
    %58 = arith.mulf %57, %49 : vector<1x2x128xf32>
    %59 = arith.cmpf oeq, %42, %25 : vector<1x2x128xf32>
    %60 = arith.cmpf oeq, %42, %32 : vector<1x2x128xf32>
    %61 = arith.subf %58, %56 : vector<1x2x128xf32>
    %cst_23 = arith.constant 2.000000e+00 : f32
    %62 = vector.broadcast %cst_23 : f32 to vector<1x2x128xf32>
    %63 = arith.addf %62, %54 : vector<1x2x128xf32>
    %64 = arith.subf %63, %58 : vector<1x2x128xf32>
    %cst_24 = arith.constant 4.000000e+00 : f32
    %65 = vector.broadcast %cst_24 : f32 to vector<1x2x128xf32>
    %66 = arith.addf %65, %56 : vector<1x2x128xf32>
    %67 = arith.subf %66, %54 : vector<1x2x128xf32>
    %68 = arith.select %60, %64, %67 : vector<1x2x128xi1>, vector<1x2x128xf32>
    %69 = arith.select %59, %61, %68 : vector<1x2x128xi1>, vector<1x2x128xf32>
    %cst_25 = arith.constant 0.166666672 : f32
    %70 = vector.broadcast %cst_25 : f32 to vector<1x2x128xf32>
    %71 = arith.mulf %69, %70 : vector<1x2x128xf32>
    %cst_26 = arith.constant 1.000000e+00 : f32
    %72 = arith.addf %cst_26, %40 : f32
    %73 = vector.broadcast %72 : f32 to vector<1x2x128xf32>
    %74 = arith.addf %71, %73 : vector<1x2x128xf32>
    %75 = math.floor %74 : vector<1x2x128xf32>
    %76 = arith.subf %74, %75 : vector<1x2x128xf32>
    %cst_27 = arith.constant 6.000000e+00 : f32
    %77 = vector.broadcast %cst_27 : f32 to vector<1x2x128xf32>
    %78 = arith.mulf %76, %77 : vector<1x2x128xf32>
    %79 = math.floor %78 : vector<1x2x128xf32>
    %80 = arith.subf %78, %79 : vector<1x2x128xf32>
    %cst_28 = arith.constant 5.000000e+00 : f32
    %81 = vector.broadcast %cst_28 : f32 to vector<1x2x128xf32>
    %82 = arith.minimumf %79, %81 : vector<1x2x128xf32>
    %cst_29 = arith.constant 1.000000e+00 : f32
    %83 = vector.broadcast %cst_29 : f32 to vector<1x2x128xf32>
    %84 = arith.subf %83, %52 : vector<1x2x128xf32>
    %85 = arith.mulf %42, %84 : vector<1x2x128xf32>
    %cst_30 = arith.constant 0.000000e+00 : f32
    %cst_31 = arith.constant 1.000000e+00 : f32
    %86 = vector.broadcast %cst_30 : f32 to vector<1x2x128xf32>
    %87 = arith.maximumf %86, %85 : vector<1x2x128xf32>
    %88 = vector.broadcast %cst_31 : f32 to vector<1x2x128xf32>
    %89 = arith.minimumf %88, %87 : vector<1x2x128xf32>
    %90 = arith.mulf %52, %80 : vector<1x2x128xf32>
    %cst_32 = arith.constant 1.000000e+00 : f32
    %91 = vector.broadcast %cst_32 : f32 to vector<1x2x128xf32>
    %92 = arith.subf %91, %90 : vector<1x2x128xf32>
    %93 = arith.mulf %42, %92 : vector<1x2x128xf32>
    %cst_33 = arith.constant 0.000000e+00 : f32
    %cst_34 = arith.constant 1.000000e+00 : f32
    %94 = vector.broadcast %cst_33 : f32 to vector<1x2x128xf32>
    %95 = arith.maximumf %94, %93 : vector<1x2x128xf32>
    %96 = vector.broadcast %cst_34 : f32 to vector<1x2x128xf32>
    %97 = arith.minimumf %96, %95 : vector<1x2x128xf32>
    %cst_35 = arith.constant 1.000000e+00 : f32
    %98 = vector.broadcast %cst_35 : f32 to vector<1x2x128xf32>
    %99 = arith.subf %98, %80 : vector<1x2x128xf32>
    %100 = arith.mulf %52, %99 : vector<1x2x128xf32>
    %cst_36 = arith.constant 1.000000e+00 : f32
    %101 = vector.broadcast %cst_36 : f32 to vector<1x2x128xf32>
    %102 = arith.subf %101, %100 : vector<1x2x128xf32>
    %103 = arith.mulf %42, %102 : vector<1x2x128xf32>
    %cst_37 = arith.constant 0.000000e+00 : f32
    %cst_38 = arith.constant 1.000000e+00 : f32
    %104 = vector.broadcast %cst_37 : f32 to vector<1x2x128xf32>
    %105 = arith.maximumf %104, %103 : vector<1x2x128xf32>
    %106 = vector.broadcast %cst_38 : f32 to vector<1x2x128xf32>
    %107 = arith.minimumf %106, %105 : vector<1x2x128xf32>
    %cst_39 = arith.constant 0.000000e+00 : f32
    %108 = vector.broadcast %cst_39 : f32 to vector<1x2x128xf32>
    %109 = arith.cmpf oeq, %82, %108 : vector<1x2x128xf32>
    %cst_40 = arith.constant 1.000000e+00 : f32
    %110 = vector.broadcast %cst_40 : f32 to vector<1x2x128xf32>
    %111 = arith.cmpf oeq, %82, %110 : vector<1x2x128xf32>
    %cst_41 = arith.constant 2.000000e+00 : f32
    %112 = vector.broadcast %cst_41 : f32 to vector<1x2x128xf32>
    %113 = arith.cmpf oeq, %82, %112 : vector<1x2x128xf32>
    %cst_42 = arith.constant 3.000000e+00 : f32
    %114 = vector.broadcast %cst_42 : f32 to vector<1x2x128xf32>
    %115 = arith.cmpf oeq, %82, %114 : vector<1x2x128xf32>
    %cst_43 = arith.constant 4.000000e+00 : f32
    %116 = vector.broadcast %cst_43 : f32 to vector<1x2x128xf32>
    %117 = arith.cmpf oeq, %82, %116 : vector<1x2x128xf32>
    %118 = arith.select %117, %107, %42 : vector<1x2x128xi1>, vector<1x2x128xf32>
    %119 = arith.select %115, %89, %118 : vector<1x2x128xi1>, vector<1x2x128xf32>
    %120 = arith.select %113, %89, %119 : vector<1x2x128xi1>, vector<1x2x128xf32>
    %121 = arith.select %111, %97, %120 : vector<1x2x128xi1>, vector<1x2x128xf32>
    %122 = arith.select %109, %42, %121 : vector<1x2x128xi1>, vector<1x2x128xf32>
    %123 = arith.select %117, %89, %89 : vector<1x2x128xi1>, vector<1x2x128xf32>
    %124 = arith.select %115, %97, %123 : vector<1x2x128xi1>, vector<1x2x128xf32>
    %125 = arith.select %113, %42, %124 : vector<1x2x128xi1>, vector<1x2x128xf32>
    %126 = arith.select %111, %42, %125 : vector<1x2x128xi1>, vector<1x2x128xf32>
    %127 = arith.select %109, %107, %126 : vector<1x2x128xi1>, vector<1x2x128xf32>
    %128 = arith.select %117, %42, %97 : vector<1x2x128xi1>, vector<1x2x128xf32>
    %129 = arith.select %115, %42, %128 : vector<1x2x128xi1>, vector<1x2x128xf32>
    %130 = arith.select %113, %107, %129 : vector<1x2x128xi1>, vector<1x2x128xf32>
    %131 = arith.select %111, %89, %130 : vector<1x2x128xi1>, vector<1x2x128xf32>
    %132 = arith.select %109, %89, %131 : vector<1x2x128xi1>, vector<1x2x128xf32>
    %c1_44 = arith.constant 1 : index
    %133 = memref.load %arg2[%c1_44] : memref<4xf32, #tpu.memory_space<smem>>
    %cst_45 = arith.constant 1.000000e+00 : f32
    %134 = arith.subf %cst_45, %133 : f32
    %135 = vector.broadcast %134 : f32 to vector<1x1x1xf32>
    %136 = arith.mulf %135, %6 : vector<1x1x1xf32>
    %137 = vector.broadcast %133 : f32 to vector<1x2x128xf32>
    %138 = arith.mulf %137, %122 : vector<1x2x128xf32>
    %139 = vector.broadcast %136 : vector<1x1x1xf32> to vector<1x2x128xf32>
    %140 = arith.addf %138, %139 : vector<1x2x128xf32>
    %cst_46 = arith.constant 0.000000e+00 : f32
    %cst_47 = arith.constant 1.000000e+00 : f32
    %141 = vector.broadcast %cst_46 : f32 to vector<1x2x128xf32>
    %142 = arith.maximumf %141, %140 : vector<1x2x128xf32>
    %143 = vector.broadcast %cst_47 : f32 to vector<1x2x128xf32>
    %144 = arith.minimumf %143, %142 : vector<1x2x128xf32>
    %145 = vector.broadcast %133 : f32 to vector<1x2x128xf32>
    %146 = arith.mulf %145, %127 : vector<1x2x128xf32>
    %147 = vector.broadcast %136 : vector<1x1x1xf32> to vector<1x2x128xf32>
    %148 = arith.addf %146, %147 : vector<1x2x128xf32>
    %cst_48 = arith.constant 0.000000e+00 : f32
    %cst_49 = arith.constant 1.000000e+00 : f32
    %149 = vector.broadcast %cst_48 : f32 to vector<1x2x128xf32>
    %150 = arith.maximumf %149, %148 : vector<1x2x128xf32>
    %151 = vector.broadcast %cst_49 : f32 to vector<1x2x128xf32>
    %152 = arith.minimumf %151, %150 : vector<1x2x128xf32>
    %153 = vector.broadcast %133 : f32 to vector<1x2x128xf32>
    %154 = arith.mulf %153, %132 : vector<1x2x128xf32>
    %155 = vector.broadcast %136 : vector<1x1x1xf32> to vector<1x2x128xf32>
    %156 = arith.addf %154, %155 : vector<1x2x128xf32>
    %cst_50 = arith.constant 0.000000e+00 : f32
    %cst_51 = arith.constant 1.000000e+00 : f32
    %157 = vector.broadcast %cst_50 : f32 to vector<1x2x128xf32>
    %158 = arith.maximumf %157, %156 : vector<1x2x128xf32>
    %159 = vector.broadcast %cst_51 : f32 to vector<1x2x128xf32>
    %160 = arith.minimumf %159, %158 : vector<1x2x128xf32>
    %c0_52 = arith.constant 0 : index
    %161 = memref.load %arg2[%c0_52] : memref<4xf32, #tpu.memory_space<smem>>
    %162 = vector.broadcast %161 : f32 to vector<1x2x128xf32>
    %163 = arith.mulf %144, %162 : vector<1x2x128xf32>
    %cst_53 = arith.constant 0.000000e+00 : f32
    %cst_54 = arith.constant 1.000000e+00 : f32
    %164 = vector.broadcast %cst_53 : f32 to vector<1x2x128xf32>
    %165 = arith.maximumf %164, %163 : vector<1x2x128xf32>
    %166 = vector.broadcast %cst_54 : f32 to vector<1x2x128xf32>
    %167 = arith.minimumf %166, %165 : vector<1x2x128xf32>
    %168 = vector.broadcast %161 : f32 to vector<1x2x128xf32>
    %169 = arith.mulf %152, %168 : vector<1x2x128xf32>
    %cst_55 = arith.constant 0.000000e+00 : f32
    %cst_56 = arith.constant 1.000000e+00 : f32
    %170 = vector.broadcast %cst_55 : f32 to vector<1x2x128xf32>
    %171 = arith.maximumf %170, %169 : vector<1x2x128xf32>
    %172 = vector.broadcast %cst_56 : f32 to vector<1x2x128xf32>
    %173 = arith.minimumf %172, %171 : vector<1x2x128xf32>
    %174 = vector.broadcast %161 : f32 to vector<1x2x128xf32>
    %175 = arith.mulf %160, %174 : vector<1x2x128xf32>
    %cst_57 = arith.constant 0.000000e+00 : f32
    %cst_58 = arith.constant 1.000000e+00 : f32
    %176 = vector.broadcast %cst_57 : f32 to vector<1x2x128xf32>
    %177 = arith.maximumf %176, %175 : vector<1x2x128xf32>
    %178 = vector.broadcast %cst_58 : f32 to vector<1x2x128xf32>
    %179 = arith.minimumf %178, %177 : vector<1x2x128xf32>
    %c0_59 = arith.constant 0 : index
    %c0_60 = arith.constant 0 : index
    %c0_61 = arith.constant 0 : index
    %c0_62 = arith.constant 0 : index
    %180 = vector.load %arg5[%c0_59, %c0_60, %c0_61, %c0_62] : memref<1x3x2x128xf32, #tpu.memory_space<vmem>>, vector<1x1x2x128xf32>
    %181 = vector.shape_cast %180 : vector<1x1x2x128xf32> to vector<1x2x128xf32>
    %182 = vector.shape_cast %167 : vector<1x2x128xf32> to vector<1x1x2x128xf32>
    tpu.vector_store %arg5[%c0_59, %c0_60, %c0_61, %c0_62], %182 {strides = array<i32>} : memref<1x3x2x128xf32, #tpu.memory_space<vmem>>, vector<1x1x2x128xf32>,
    %c0_63 = arith.constant 0 : index
    %c1_64 = arith.constant 1 : index
    %c0_65 = arith.constant 0 : index
    %c0_66 = arith.constant 0 : index
    %183 = vector.load %arg5[%c0_63, %c1_64, %c0_65, %c0_66] : memref<1x3x2x128xf32, #tpu.memory_space<vmem>>, vector<1x1x2x128xf32>
    %184 = vector.shape_cast %183 : vector<1x1x2x128xf32> to vector<1x2x128xf32>
    %185 = vector.shape_cast %173 : vector<1x2x128xf32> to vector<1x1x2x128xf32>
    tpu.vector_store %arg5[%c0_63, %c1_64, %c0_65, %c0_66], %185 {strides = array<i32>} : memref<1x3x2x128xf32, #tpu.memory_space<vmem>>, vector<1x1x2x128xf32>,
    %c0_67 = arith.constant 0 : index
    %c2_68 = arith.constant 2 : index
    %c0_69 = arith.constant 0 : index
    %c0_70 = arith.constant 0 : index
    %186 = vector.load %arg5[%c0_67, %c2_68, %c0_69, %c0_70] : memref<1x3x2x128xf32, #tpu.memory_space<vmem>>, vector<1x1x2x128xf32>
    %187 = vector.shape_cast %186 : vector<1x1x2x128xf32> to vector<1x2x128xf32>
    %188 = vector.shape_cast %179 : vector<1x2x128xf32> to vector<1x1x2x128xf32>
    tpu.vector_store %arg5[%c0_67, %c2_68, %c0_69, %c0_70], %188 {strides = array<i32>} : memref<1x3x2x128xf32, #tpu.memory_space<vmem>>, vector<1x1x2x128xf32>,
    return
  }
  func.func @transform_0(%arg0: i32, %arg1: i32) -> i32 {
    %c0_i32 = arith.constant 0 : i32
    %c0_i32_0 = arith.constant 0 : i32
    return %c0_i32 : i32
  }
  func.func @transform_1(%arg0: i32, %arg1: i32) -> (i32, i32, i32) {
    %c0_i32 = arith.constant 0 : i32
    %c0_i32_0 = arith.constant 0 : i32
    %c0_i32_1 = arith.constant 0 : i32
    return %arg0, %c0_i32, %c0_i32_0 : i32, i32, i32
  }
  func.func @transform_2(%arg0: i32, %arg1: i32) -> (i32, i32, i32, i32) {
    %c0_i32 = arith.constant 0 : i32
    %c0_i32_0 = arith.constant 0 : i32
    %c0_i32_1 = arith.constant 0 : i32
    return %arg0, %c0_i32, %arg1, %c0_i32_0 : i32, i32, i32, i32
  }
  func.func @transform_3(%arg0: i32, %arg1: i32) -> (i32, i32, i32, i32) {
    %c0_i32 = arith.constant 0 : i32
    %c0_i32_0 = arith.constant 0 : i32
    %c0_i32_1 = arith.constant 0 : i32
    return %arg0, %c0_i32, %arg1, %c0_i32_0 : i32, i32, i32, i32
  }
}

</mosaic_0001>

<llo_original>
// kernel: fn.2
$region0: #{fn.2}
  #allocation0 [shape = 'u32[]', space=smem, size = 0x4, offset = 0x4, fixed_abs, tag = 'smem constant byte address 0x4 - core index']
  #allocation1 [shape = 'u32[144,128]{1,0:T(1,128)}', space=vmem, size = 0x12000, scoped, tag = 'internal scratch']
  %s0 = inlined_call_operand.vmem [shape: f32[4], index: 0, kind: input, shape index: {}]
  %s1 = inlined_call_operand.vmem [shape: f32[2,3,2,128], index: 1, kind: input, shape index: {}]
  %s2 = inlined_call_operand.vmem [shape: f32[2,1,1], index: 2, kind: output, shape index: {}]
  %s3 = sld [smem:[#allocation0]]
  $region49: #{fn.2} parent=0
    _
  %s5 = ssub.s32 1, %s3
  %s6 = scalar_select 0, %s5, %s3
  $region1: #{fn.2} parent=0
    #allocation2 [shape = 'u8[512]{0}', space=smem, size = 0x200, scoped, tag = 'input window, operand 0, single buffered']
    #allocation3 [shape = 's32[2]{0}', space=sflag, size = 0x8, scoped, tag = 'scoped memory for fn.2']
    %7 = vsyncpa [#allocation3], 0
    loop: start=0, step=1, limit=4
    $region2: #{fn.2} parent=1 // loop_pre_header
      _
    $region3: #{fn.2} parent=1 // loop_header
      %s9 = sphi 0, %s13
      %p10 = scmp.ge.s32.totalorder %s9, 4
      %s16 = sphi 0, %s28
      %s17 = sphi 0, %s24
      %s18 = sphi 0, %s16
      %s19 = sphi 0, %s17
      %s20 = sphi 0, %s18
      %s21 = sphi 0, %s19
      %s29 = sphi 0, %s29
      %s31 = sphi 0, %s29
      %s32 = sphi 0, %s31
      %s46 = sphi 0, %s32
      %s54 = sphi 0, %s56
      %s57 = sphi 0, %s54
      %s58 = sphi 0, %s57
      %s74 = sphi 0, %s58
      %s80 = sphi 0, %s82
      %s83 = sphi 0, %s80
      %s84 = sphi 0, %s83
      %s100 = sphi 0, %s84
    $region4: #{fn.2} parent=1 // loop_header_branch
      %12 = sbr.rel (%p10) target = $region8
    $region5: #{fn.2} parent=1 // loop_body
      %s14 = ssub.s32 %s9, 1
      %s15 = ssub.s32 %s9, 2
      %s22 = sadd.s32 1, %s17
      %p23 = scmp.ge.s32.totalorder %s22, 1
      %s24 = scalar_select %p23, 0, %s22
      %s25 = sadd.s32 1, %s16
      %s26 = scalar_select %p23, %s25, %s16
      %p27 = scmp.ge.s32.totalorder %s26, 2
      %s28 = scalar_select %p27, 0, %s26
      %s30 = sadd.s32 %s29, 1
      %p33 = scmp.eq.s32.totalorder %s9, 1
      %p34 = scmp.ne.s32.totalorder %s29, %s31
      %p35 = scmp.eq.s32.totalorder %s9, 0
      %p36 = por %p34, %p35
      %p37 = scmp.ne.s32.totalorder %s29, %s31
      %p38 = scmp.eq.s32.totalorder %s14, 1
      %p39 = por %p37, %p38
      %p40 = scmp.ne.s32.totalorder %s31, %s32
      %p41 = scmp.eq.s32.totalorder %s14, 0
      %p42 = por %p40, %p41
      %p43 = scmp.ne.s32.totalorder %s31, %s32
      %p44 = scmp.eq.s32.totalorder %s15, 1
      %p45 = por %p43, %p44
      %p47 = scmp.ne.s32.totalorder %s32, %s46
      %p48 = scmp.eq.s32.totalorder %s15, 0
      %p49 = por %p47, %p48
      %s50 = ssub.s32 %s16, %s28
      %s51 = ssub.s32 %s17, %s24
      %s52 = sor.u32 %s50, %s51
      %p53 = scmp.eq.s32.totalorder %s52, 0
      %s55 = sadd.s32 %s54, 1
      %s56 = scalar_select %p53, %s54, %s55
      %p59 = pneg %p53
      %p60 = scmp.eq.s32.totalorder %s9, 1
      %p61 = por %p59, %p60
      %p62 = scmp.ne.s32.totalorder %s54, %s57
      %p63 = scmp.eq.s32.totalorder %s9, 0
      %p64 = por %p62, %p63
      %p65 = scmp.ne.s32.totalorder %s54, %s57
      %p66 = scmp.eq.s32.totalorder %s14, 1
      %p67 = por %p65, %p66
      %p68 = scmp.ne.s32.totalorder %s57, %s58
      %p69 = scmp.eq.s32.totalorder %s14, 0
      %p70 = por %p68, %p69
      %p71 = scmp.ne.s32.totalorder %s57, %s58
      %p72 = scmp.eq.s32.totalorder %s15, 1
      %p73 = por %p71, %p72
      %p75 = scmp.ne.s32.totalorder %s58, %s74
      %p76 = scmp.eq.s32.totalorder %s15, 0
      %p77 = por %p75, %p76
      %s78 = ssub.s32 %s16, %s28
      %p79 = scmp.eq.s32.totalorder %s78, 0
      %s81 = sadd.s32 %s80, 1
      %s82 = scalar_select %p79, %s80, %s81
      %p85 = pneg %p79
      %p86 = scmp.eq.s32.totalorder %s9, 1
      %p87 = por %p85, %p86
      %p88 = scmp.ne.s32.totalorder %s80, %s83
      %p89 = scmp.eq.s32.totalorder %s9, 0
      %p90 = por %p88, %p89
      %p91 = scmp.ne.s32.totalorder %s80, %s83
      %p92 = scmp.eq.s32.totalorder %s14, 1
      %p93 = por %p91, %p92
      %p94 = scmp.ne.s32.totalorder %s83, %s84
      %p95 = scmp.eq.s32.totalorder %s14, 0
      %p96 = por %p94, %p95
      %p97 = scmp.ne.s32.totalorder %s83, %s84
      %p98 = scmp.eq.s32.totalorder %s15, 1
      %p99 = por %p97, %p98
      %p101 = scmp.ne.s32.totalorder %s84, %s100
      %p102 = scmp.eq.s32.totalorder %s15, 0
      %p103 = por %p101, %p102
      %p104 = scmp.le.s32.totalorder 1, %s9
      %p105 = scmp.lt.s32.totalorder %s9, 3
      %p106 = pnand %p104, %p105
      %p107 = pneg %p106
      // Predicated region
      $region9: #{fn.2} parent=5 // pred_check
        _
      $region10: #{fn.2} parent=5 // pred_check_branch
        %109 = sbr.rel (%p106) target = $region12
      $region11: #{fn.2} parent=5 // pred_region
        %s110 = ssub.s32 %s9, 1
        // Predicated region
        $region13: #{fn.2} parent=11 // pred_check
          %p111 = pneg %p42
        $region14: #{fn.2} parent=11 // pred_check_branch
          %113 = sbr.rel (%p111) target = $region16
        $region15: #{fn.2} parent=11 // pred_region
          %s115 = ssub.s32 16, 16
          %116 = vsyncadd [#allocation3], %s115
          %s118 = sshll.u32 %s0, 4
          %s119 = int_to_ptr.vmem [resolvable:$true] %s118
          %121 = dma.vmem_to_smem %s119, 16, [#allocation2], [#allocation3]
        $region16: #{fn.2} parent=11 // pred_fallthru
          _
      $region12: #{fn.2} parent=5 // pred_fallthru
        _
      %p122 = scmp.lt.s32.totalorder %s9, 2
      // Predicated region
      $region17: #{fn.2} parent=5 // pred_check
        %p123 = pneg %p122
      $region18: #{fn.2} parent=5 // pred_check_branch
        %125 = sbr.rel (%p123) target = $region20
      $region19: #{fn.2} parent=5 // pred_region
        // Predicated region
        $region21: #{fn.2} parent=19 // pred_check
          %p126 = pneg %p64
        $region22: #{fn.2} parent=19 // pred_check_branch
          %128 = sbr.rel (%p126) target = $region24
        $region23: #{fn.2} parent=19 // pred_region
          %p129 = scmp.lt.s32.totalorder %s16, 1
          %s130 = scalar_select %p129, %s16, 1
          %p131 = scmp.lt.s32.totalorder %s17, 0
          %s132 = scalar_select %p131, %s17, 0
          %s133 = smul.addr %s130, 3
          %s134 = sadd.s32 %s132, %s133
          %s135 = smul.addr %s134, 2
          %s136 = scalar_lea.vmem %s1, %s135
        $region24: #{fn.2} parent=19 // pred_fallthru
          _
      $region20: #{fn.2} parent=5 // pred_fallthru
        _
      %p137 = scmp.le.s32.totalorder 1, %s9
      %p138 = scmp.lt.s32.totalorder %s9, 3
      %p139 = pnand %p137, %p138
      %p140 = pneg %p139
      // Predicated region
      $region25: #{fn.2} parent=5 // pred_check
        _
      $region26: #{fn.2} parent=5 // pred_check_branch
        %142 = sbr.rel (%p139) target = $region28
      $region27: #{fn.2} parent=5 // pred_region
        %s143 = ssub.s32 %s9, 1
        // Predicated region
        $region29: #{fn.2} parent=27 // pred_check
          %p144 = pneg %p42
        $region30: #{fn.2} parent=27 // pred_check_branch
          %146 = sbr.rel (%p144) target = $region32
        $region31: #{fn.2} parent=27 // pred_region
          %147 = dma.done [#allocation3], 16
        $region32: #{fn.2} parent=27 // pred_fallthru
          _
        %148 = sfence
        %p149 = pneg %p42
        %p150 = pneg %p39
        %p151 = scmp.lt.s32.totalorder %s18, 1
        %s152 = scalar_select %p151, %s18, 1
        %p153 = scmp.lt.s32.totalorder %s19, 0
        %s154 = scalar_select %p153, %s19, 0
        %s155 = smul.addr %s152, 3
        %s156 = sadd.s32 %s154, %s155
        %s157 = smul.addr %s156, 2
        %s158 = scalar_lea.vmem %s1, %s157
        %p159 = pneg %p70
        %p160 = pneg %p67
        %p161 = pneg %p96
        %p162 = pneg %p93
        %p163 = scmp.lt.s32.totalorder %s18, 1
        %s164 = scalar_select %p163, %s18, 1
        %s165 = scalar_lea.vmem %s2, %s164
        %p166 = scmp.lt.s32.totalorder %s18, 1
        %s167 = scalar_select %p166, %s18, 1
        %p168 = scmp.lt.s32.totalorder %s19, 0
        %s169 = scalar_select %p168, %s19, 0
        %s170 = smul.addr %s167, 3
        %s171 = sadd.s32 %s169, %s170
        %s172 = smul.addr %s171, 2
        %s173 = scalar_lea.vmem %s1, %s172
        %p174 = scmp.lt.s32.totalorder %s18, 1
        %s175 = scalar_select %p174, %s18, 1
        %s176 = scalar_lea.vmem %s2, %s175
        %v177 = vld [vmem:[%s173] sm:$0x3]
        %s178 = scalar_lea.vmem %s173, 2
        %v179 = vld [vmem:[%s178] sm:$0x3]
        %s180 = scalar_lea.vmem %s173, 4
        %v181 = vld [vmem:[%s180] sm:$0x3]
        %s182 = sld [smem:[#allocation2 + $0x2]]
        %s183 = ssub.f32 1.0, %s182
        %v184 = vmul.f32 %v177, 0.2989
        %v185 = vmul.f32 %v179, 0.587
        %v186 = vadd.f32 %v184, %v185
        %v187 = vmul.f32 %v181, 0.114
        %v188 = vadd.f32 %v186, %v187
        %v189 = vstv %s183
        %v190 = vmul.f32 %v189, %v188
        %v191 = vstv %s182
        %v192 = vmul.f32 %v191, %v177
        %v193 = vadd.f32 %v192, %v190
        %v194 = vmax.f32 %v193, 0.0
        %v195 = vmin.f32 %v194, 1.0
        %v196 = vmul.f32 %v191, %v179
        %v197 = vadd.f32 %v196, %v190
        %v198 = vmax.f32 %v197, 0.0
        %v199 = vmin.f32 %v198, 1.0
        %v200 = vmul.f32 %v191, %v181
        %v201 = vadd.f32 %v200, %v190
        %v202 = vmax.f32 %v201, 0.0
        %v203 = vmin.f32 %v202, 1.0
        %s204 = sld [smem:[#allocation2 + $0x3]]
        %v205 = vmax.f32 %v195, %v199
        %v206 = vmax.f32 %v205, %v203
        %v207 = vmin.f32 %v195, %v199
        %v208 = vmin.f32 %v207, %v203
        %vm209 = vcmp.eq.f32.partialorder %v206, %v208
        %v210 = vsub.f32 %v206, %v208
        %v211 = vsel %vm209, 1.0, %v210
        %v212 = vrcp.pop %v211
        %v213 = vsel %vm209, 1.0, %v206
        %v214 = vrcp.pop %v213
        %v215 = vmul.f32 %v210, %v214
        %v216 = vsub.f32 %v206, %v195
        %v217 = vmul.f32 %v216, %v212
        %v218 = vsub.f32 %v206, %v199
        %v219 = vmul.f32 %v218, %v212
        %v220 = vsub.f32 %v206, %v203
        %v221 = vmul.f32 %v220, %v212
        %vm222 = vcmp.eq.f32.partialorder %v206, %v195
        %vm223 = vcmp.eq.f32.partialorder %v206, %v199
        %v224 = vsub.f32 %v221, %v219
        %v225 = vadd.f32 %v217, 2.0
        %v226 = vsub.f32 %v225, %v221
        %v227 = vadd.f32 %v219, 4.0
        %v228 = vsub.f32 %v227, %v217
        %v229 = vsel %vm223, %v226, %v228
        %v230 = vsel %vm222, %v224, %v229
        %v231 = vmul.f32 %v230, 0.16666667
        %s232 = sadd.f32 %s204, 1.0
        %v233 = vstv %s232
        %v234 = vadd.f32 %v231, %v233
        %v235 = vfloor.f32 %v234
        %v236 = vsub.f32 %v234, %v235
        %v237 = vmul.f32 %v236, 6.0
        %v238 = vfloor.f32 %v237
        %v239 = vsub.f32 %v237, %v238
        %v240 = vmin.f32 %v238, 5.0
        %v241 = vsub.f32 1.0, %v215
        %v242 = vmul.f32 %v206, %v241
        %v243 = vmax.f32 %v242, 0.0
        %v244 = vmin.f32 %v243, 1.0
        %v245 = vmul.f32 %v215, %v239
        %v246 = vsub.f32 1.0, %v245
        %v247 = vmul.f32 %v206, %v246
        %v248 = vmax.f32 %v247, 0.0
        %v249 = vmin.f32 %v248, 1.0
        %v250 = vsub.f32 1.0, %v239
        %v251 = vmul.f32 %v215, %v250
        %v252 = vsub.f32 1.0, %v251
        %v253 = vmul.f32 %v206, %v252
        %v254 = vmax.f32 %v253, 0.0
        %v255 = vmin.f32 %v254, 1.0
        %vm256 = vcmp.eq.f32.partialorder %v240, 0.0
        %vm257 = vcmp.eq.f32.partialorder %v240, 1.0
        %vm258 = vcmp.eq.f32.partialorder %v240, 2.0
        %vm259 = vcmp.eq.f32.partialorder %v240, 3.0
        %vm260 = vcmp.eq.f32.partialorder %v240, 4.0
        %v261 = vsel %vm260, %v255, %v206
        %v262 = vsel %vm259, %v244, %v261
        %v263 = vsel %vm258, %v244, %v262
        %v264 = vsel %vm257, %v249, %v263
        %v265 = vsel %vm256, %v206, %v264
        %v266 = vsel %vm259, %v249, %v244
        %v267 = vsel %vm258, %v206, %v266
        %v268 = vsel %vm257, %v206, %v267
        %v269 = vsel %vm256, %v255, %v268
        %v270 = vsel %vm260, %v206, %v249
        %v271 = vsel %vm259, %v206, %v270
        %v272 = vsel %vm258, %v255, %v271
        %v273 = vsel %vm257, %v244, %v272
        %v274 = vsel %vm256, %v244, %v273
        %vm275 = vcmask 1041408
        %v276 = vsel %vm275, %v265, 0.0
        %277 = vadd.xlane.f32.xlu0 %v276
        %v278 = vpop.xlane.xlu0 %277
        %v279 = vsel %vm275, %v278, 0.0
        %v280 = vrot.slane %v279, 4
        %v281 = vadd.f32 %v279, %v280
        %v282 = vrot.slane %v281, 2
        %v283 = vadd.f32 %v281, %v282
        %v284 = vrot.slane %v283, 1
        %v285 = vadd.f32 %v283, %v284
        %v286 = vmul.f32 %v285, 0.2989
        %v287 = vsel %vm275, %v269, 0.0
        %288 = vadd.xlane.f32.xlu0 %v287
        %v289 = vpop.xlane.xlu0 %288
        %v290 = vsel %vm275, %v289, 0.0
        %v291 = vrot.slane %v290, 4
        %v292 = vadd.f32 %v290, %v291
        %v293 = vrot.slane %v292, 2
        %v294 = vadd.f32 %v292, %v293
        %v295 = vrot.slane %v294, 1
        %v296 = vadd.f32 %v294, %v295
        %v297 = vmul.f32 %v296, 0.587
        %v298 = vadd.f32 %v286, %v297
        %v299 = vsel %vm275, %v274, 0.0
        %300 = vadd.xlane.f32.xlu0 %v299
        %v301 = vpop.xlane.xlu0 %300
        %v302 = vsel %vm275, %v301, 0.0
        %v303 = vrot.slane %v302, 4
        %v304 = vadd.f32 %v302, %v303
        %v305 = vrot.slane %v304, 2
        %v306 = vadd.f32 %v304, %v305
        %v307 = vrot.slane %v306, 1
        %v308 = vadd.f32 %v306, %v307
        %v309 = vmul.f32 %v308, 0.114
        %v310 = vadd.f32 %v298, %v309
        %p311 = scmp.eq.s32.totalorder %s19, 0
        // Predicated region
        $region33: #{fn.2} parent=27 // pred_check
          %p312 = pneg %p311
        $region34: #{fn.2} parent=27 // pred_check_branch
          %314 = sbr.rel (%p312) target = $region36
        $region35: #{fn.2} parent=27 // pred_region
          %vm315 = vcmask 0
          %316 = vst.msk [vmem:[%s176] sm:$0x1] %vm315, 0.0
        $region36: #{fn.2} parent=27 // pred_fallthru
          _
        %v317 = vld [vmem:[%s176] sm:$0x1]
        %v318 = vadd.f32 %v317, %v310
        %vm319 = vcmask 0
        %320 = vst.msk [vmem:[%s176] sm:$0x1] %vm319, %v318
        %p321 = scmp.lt.s32.totalorder %s18, 1
        %s322 = scalar_select %p321, %s18, 1
        %s323 = scalar_lea.vmem %s2, %s322
        // Predicated region
        $region37: #{fn.2} parent=27 // pred_check
          %p324 = pneg %p93
        $region38: #{fn.2} parent=27 // pred_check_branch
          %326 = sbr.rel (%p324) target = $region40
        $region39: #{fn.2} parent=27 // pred_region
          _
        $region40: #{fn.2} parent=27 // pred_fallthru
          _
      $region28: #{fn.2} parent=5 // pred_fallthru
        _
      %p327 = scmp.le.s32.totalorder 2, %s9
      // Predicated region
      $region41: #{fn.2} parent=5 // pred_check
        %p328 = pneg %p327
      $region42: #{fn.2} parent=5 // pred_check_branch
        %330 = sbr.rel (%p328) target = $region44
      $region43: #{fn.2} parent=5 // pred_region
        %s331 = ssub.s32 %s9, 2
        // Predicated region
        $region45: #{fn.2} parent=43 // pred_check
          %p332 = pneg %p99
        $region46: #{fn.2} parent=43 // pred_check_branch
          %334 = sbr.rel (%p332) target = $region48
        $region47: #{fn.2} parent=43 // pred_region
          %p335 = scmp.lt.s32.totalorder %s20, 1
          %s336 = scalar_select %p335, %s20, 1
          %s337 = scalar_lea.vmem %s2, %s336
        $region48: #{fn.2} parent=43 // pred_fallthru
          _
      $region44: #{fn.2} parent=5 // pred_fallthru
        _
    $region6: #{fn.2} parent=1 // loop_footer
      %s13 = sadd.s32 1, %s9
    $region7: #{fn.2} parent=1 // loop_footer_branch
      %8 = sbr.rel target = $region3
    $region8: #{fn.2} parent=1 // loop_exit
      _
    %338 = vsyncpa [#allocation3], 1
    %s339 = scalar_lea.sflag [#allocation3], 1
    %340 = vsyncpa %s339, 1

// kernel: fn.3
$region0: #{fn.3}
  #allocation0 [shape = 'u32[]', space=smem, size = 0x4, offset = 0x4, fixed_abs, tag = 'smem constant byte address 0x4 - core index']
  #allocation1 [shape = 'u32[144,128]{1,0:T(1,128)}', space=vmem, size = 0x12000, scoped, tag = 'internal scratch']
  %s0 = inlined_call_operand.vmem [shape: f32[4], index: 0, kind: input, shape index: {}]
  %s1 = inlined_call_operand.vmem [shape: f32[2,1,1], index: 1, kind: input, shape index: {}]
  %s2 = inlined_call_operand.vmem [shape: f32[2,3,2,128], index: 2, kind: input, shape index: {}]
  %s3 = inlined_call_operand.vmem [shape: f32[2,3,2,128], index: 3, kind: output, shape index: {}]
  %s4 = sld [smem:[#allocation0]]
  $region49: #{fn.3} parent=0
    _
  %s6 = ssub.s32 1, %s4
  %s7 = scalar_select 0, %s6, %s4
  $region1: #{fn.3} parent=0
    #allocation2 [shape = 'u8[512]{0}', space=smem, size = 0x200, scoped, tag = 'input window, operand 0, single buffered']
    #allocation3 [shape = 's32[2]{0}', space=sflag, size = 0x8, scoped, tag = 'scoped memory for fn.3']
    %8 = vsyncpa [#allocation3], 0
    loop: start=0, step=1, limit=4
    $region2: #{fn.3} parent=1 // loop_pre_header
      _
    $region3: #{fn.3} parent=1 // loop_header
      %s10 = sphi 0, %s14
      %p11 = scmp.ge.s32.totalorder %s10, 4
      %s17 = sphi 0, %s29
      %s18 = sphi 0, %s25
      %s19 = sphi 0, %s17
      %s20 = sphi 0, %s18
      %s21 = sphi 0, %s19
      %s22 = sphi 0, %s20
      %s30 = sphi 0, %s30
      %s32 = sphi 0, %s30
      %s33 = sphi 0, %s32
      %s47 = sphi 0, %s33
      %s53 = sphi 0, %s55
      %s56 = sphi 0, %s53
      %s57 = sphi 0, %s56
      %s73 = sphi 0, %s57
      %s81 = sphi 0, %s83
      %s84 = sphi 0, %s81
      %s85 = sphi 0, %s84
      %s101 = sphi 0, %s85
      %s109 = sphi 0, %s111
      %s112 = sphi 0, %s109
      %s113 = sphi 0, %s112
      %s129 = sphi 0, %s113
    $region4: #{fn.3} parent=1 // loop_header_branch
      %13 = sbr.rel (%p11) target = $region8
    $region5: #{fn.3} parent=1 // loop_body
      %s15 = ssub.s32 %s10, 1
      %s16 = ssub.s32 %s10, 2
      %s23 = sadd.s32 1, %s18
      %p24 = scmp.ge.s32.totalorder %s23, 1
      %s25 = scalar_select %p24, 0, %s23
      %s26 = sadd.s32 1, %s17
      %s27 = scalar_select %p24, %s26, %s17
      %p28 = scmp.ge.s32.totalorder %s27, 2
      %s29 = scalar_select %p28, 0, %s27
      %s31 = sadd.s32 %s30, 1
      %p34 = scmp.eq.s32.totalorder %s10, 1
      %p35 = scmp.ne.s32.totalorder %s30, %s32
      %p36 = scmp.eq.s32.totalorder %s10, 0
      %p37 = por %p35, %p36
      %p38 = scmp.ne.s32.totalorder %s30, %s32
      %p39 = scmp.eq.s32.totalorder %s15, 1
      %p40 = por %p38, %p39
      %p41 = scmp.ne.s32.totalorder %s32, %s33
      %p42 = scmp.eq.s32.totalorder %s15, 0
      %p43 = por %p41, %p42
      %p44 = scmp.ne.s32.totalorder %s32, %s33
      %p45 = scmp.eq.s32.totalorder %s16, 1
      %p46 = por %p44, %p45
      %p48 = scmp.ne.s32.totalorder %s33, %s47
      %p49 = scmp.eq.s32.totalorder %s16, 0
      %p50 = por %p48, %p49
      %s51 = ssub.s32 %s17, %s29
      %p52 = scmp.eq.s32.totalorder %s51, 0
      %s54 = sadd.s32 %s53, 1
      %s55 = scalar_select %p52, %s53, %s54
      %p58 = pneg %p52
      %p59 = scmp.eq.s32.totalorder %s10, 1
      %p60 = por %p58, %p59
      %p61 = scmp.ne.s32.totalorder %s53, %s56
      %p62 = scmp.eq.s32.totalorder %s10, 0
      %p63 = por %p61, %p62
      %p64 = scmp.ne.s32.totalorder %s53, %s56
      %p65 = scmp.eq.s32.totalorder %s15, 1
      %p66 = por %p64, %p65
      %p67 = scmp.ne.s32.totalorder %s56, %s57
      %p68 = scmp.eq.s32.totalorder %s15, 0
      %p69 = por %p67, %p68
      %p70 = scmp.ne.s32.totalorder %s56, %s57
      %p71 = scmp.eq.s32.totalorder %s16, 1
      %p72 = por %p70, %p71
      %p74 = scmp.ne.s32.totalorder %s57, %s73
      %p75 = scmp.eq.s32.totalorder %s16, 0
      %p76 = por %p74, %p75
      %s77 = ssub.s32 %s17, %s29
      %s78 = ssub.s32 %s18, %s25
      %s79 = sor.u32 %s77, %s78
      %p80 = scmp.eq.s32.totalorder %s79, 0
      %s82 = sadd.s32 %s81, 1
      %s83 = scalar_select %p80, %s81, %s82
      %p86 = pneg %p80
      %p87 = scmp.eq.s32.totalorder %s10, 1
      %p88 = por %p86, %p87
      %p89 = scmp.ne.s32.totalorder %s81, %s84
      %p90 = scmp.eq.s32.totalorder %s10, 0
      %p91 = por %p89, %p90
      %p92 = scmp.ne.s32.totalorder %s81, %s84
      %p93 = scmp.eq.s32.totalorder %s15, 1
      %p94 = por %p92, %p93
      %p95 = scmp.ne.s32.totalorder %s84, %s85
      %p96 = scmp.eq.s32.totalorder %s15, 0
      %p97 = por %p95, %p96
      %p98 = scmp.ne.s32.totalorder %s84, %s85
      %p99 = scmp.eq.s32.totalorder %s16, 1
      %p100 = por %p98, %p99
      %p102 = scmp.ne.s32.totalorder %s85, %s101
      %p103 = scmp.eq.s32.totalorder %s16, 0
      %p104 = por %p102, %p103
      %s105 = ssub.s32 %s17, %s29
      %s106 = ssub.s32 %s18, %s25
      %s107 = sor.u32 %s105, %s106
      %p108 = scmp.eq.s32.totalorder %s107, 0
      %s110 = sadd.s32 %s109, 1
      %s111 = scalar_select %p108, %s109, %s110
      %p114 = pneg %p108
      %p115 = scmp.eq.s32.totalorder %s10, 1
      %p116 = por %p114, %p115
      %p117 = scmp.ne.s32.totalorder %s109, %s112
      %p118 = scmp.eq.s32.totalorder %s10, 0
      %p119 = por %p117, %p118
      %p120 = scmp.ne.s32.totalorder %s109, %s112
      %p121 = scmp.eq.s32.totalorder %s15, 1
      %p122 = por %p120, %p121
      %p123 = scmp.ne.s32.totalorder %s112, %s113
      %p124 = scmp.eq.s32.totalorder %s15, 0
      %p125 = por %p123, %p124
      %p126 = scmp.ne.s32.totalorder %s112, %s113
      %p127 = scmp.eq.s32.totalorder %s16, 1
      %p128 = por %p126, %p127
      %p130 = scmp.ne.s32.totalorder %s113, %s129
      %p131 = scmp.eq.s32.totalorder %s16, 0
      %p132 = por %p130, %p131
      %p133 = scmp.le.s32.totalorder 1, %s10
      %p134 = scmp.lt.s32.totalorder %s10, 3
      %p135 = pnand %p133, %p134
      %p136 = pneg %p135
      // Predicated region
      $region9: #{fn.3} parent=5 // pred_check
        _
      $region10: #{fn.3} parent=5 // pred_check_branch
        %138 = sbr.rel (%p135) target = $region12
      $region11: #{fn.3} parent=5 // pred_region
        %s139 = ssub.s32 %s10, 1
        // Predicated region
        $region13: #{fn.3} parent=11 // pred_check
          %p140 = pneg %p43
        $region14: #{fn.3} parent=11 // pred_check_branch
          %142 = sbr.rel (%p140) target = $region16
        $region15: #{fn.3} parent=11 // pred_region
          %s144 = ssub.s32 16, 16
          %145 = vsyncadd [#allocation3], %s144
          %s147 = sshll.u32 %s0, 4
          %s148 = int_to_ptr.vmem [resolvable:$true] %s147
          %150 = dma.vmem_to_smem %s148, 16, [#allocation2], [#allocation3]
        $region16: #{fn.3} parent=11 // pred_fallthru
          _
      $region12: #{fn.3} parent=5 // pred_fallthru
        _
      %p151 = scmp.lt.s32.totalorder %s10, 2
      // Predicated region
      $region17: #{fn.3} parent=5 // pred_check
        %p152 = pneg %p151
      $region18: #{fn.3} parent=5 // pred_check_branch
        %154 = sbr.rel (%p152) target = $region20
      $region19: #{fn.3} parent=5 // pred_region
        // Predicated region
        $region21: #{fn.3} parent=19 // pred_check
          %p155 = pneg %p63
        $region22: #{fn.3} parent=19 // pred_check_branch
          %157 = sbr.rel (%p155) target = $region24
        $region23: #{fn.3} parent=19 // pred_region
          %p158 = scmp.lt.s32.totalorder %s17, 1
          %s159 = scalar_select %p158, %s17, 1
          %s160 = scalar_lea.vmem %s1, %s159
        $region24: #{fn.3} parent=19 // pred_fallthru
          _
        // Predicated region
        $region25: #{fn.3} parent=19 // pred_check
          %p161 = pneg %p91
        $region26: #{fn.3} parent=19 // pred_check_branch
          %163 = sbr.rel (%p161) target = $region28
        $region27: #{fn.3} parent=19 // pred_region
          %p164 = scmp.lt.s32.totalorder %s17, 1
          %s165 = scalar_select %p164, %s17, 1
          %p166 = scmp.lt.s32.totalorder %s18, 0
          %s167 = scalar_select %p166, %s18, 0
          %s168 = smul.addr %s165, 3
          %s169 = sadd.s32 %s167, %s168
          %s170 = smul.addr %s169, 2
          %s171 = scalar_lea.vmem %s2, %s170
        $region28: #{fn.3} parent=19 // pred_fallthru
          _
      $region20: #{fn.3} parent=5 // pred_fallthru
        _
      %p172 = scmp.le.s32.totalorder 1, %s10
      %p173 = scmp.lt.s32.totalorder %s10, 3
      %p174 = pnand %p172, %p173
      %p175 = pneg %p174
      // Predicated region
      $region29: #{fn.3} parent=5 // pred_check
        _
      $region30: #{fn.3} parent=5 // pred_check_branch
        %177 = sbr.rel (%p174) target = $region32
      $region31: #{fn.3} parent=5 // pred_region
        %s178 = ssub.s32 %s10, 1
        // Predicated region
        $region33: #{fn.3} parent=31 // pred_check
          %p179 = pneg %p43
        $region34: #{fn.3} parent=31 // pred_check_branch
          %181 = sbr.rel (%p179) target = $region36
        $region35: #{fn.3} parent=31 // pred_region
          %182 = dma.done [#allocation3], 16
        $region36: #{fn.3} parent=31 // pred_fallthru
          _
        %183 = sfence
        %p184 = pneg %p43
        %p185 = pneg %p40
        %p186 = scmp.lt.s32.totalorder %s19, 1
        %s187 = scalar_select %p186, %s19, 1
        %s188 = scalar_lea.vmem %s1, %s187
        %p189 = pneg %p69
        %p190 = pneg %p66
        %p191 = scmp.lt.s32.totalorder %s19, 1
        %s192 = scalar_select %p191, %s19, 1
        %p193 = scmp.lt.s32.totalorder %s20, 0
        %s194 = scalar_select %p193, %s20, 0
        %s195 = smul.addr %s192, 3
        %s196 = sadd.s32 %s194, %s195
        %s197 = smul.addr %s196, 2
        %s198 = scalar_lea.vmem %s2, %s197
        %p199 = pneg %p97
        %p200 = pneg %p94
        %p201 = pneg %p125
        %p202 = pneg %p122
        %p203 = scmp.lt.s32.totalorder %s19, 1
        %s204 = scalar_select %p203, %s19, 1
        %p205 = scmp.lt.s32.totalorder %s20, 0
        %s206 = scalar_select %p205, %s20, 0
        %s207 = smul.addr %s204, 3
        %s208 = sadd.s32 %s206, %s207
        %s209 = smul.addr %s208, 2
        %s210 = scalar_lea.vmem %s3, %s209
        %p211 = scmp.lt.s32.totalorder %s19, 1
        %s212 = scalar_select %p211, %s19, 1
        %s213 = scalar_lea.vmem %s1, %s212
        %p214 = scmp.lt.s32.totalorder %s19, 1
        %s215 = scalar_select %p214, %s19, 1
        %p216 = scmp.lt.s32.totalorder %s20, 0
        %s217 = scalar_select %p216, %s20, 0
        %s218 = smul.addr %s215, 3
        %s219 = sadd.s32 %s217, %s218
        %s220 = smul.addr %s219, 2
        %s221 = scalar_lea.vmem %s2, %s220
        %p222 = scmp.lt.s32.totalorder %s19, 1
        %s223 = scalar_select %p222, %s19, 1
        %p224 = scmp.lt.s32.totalorder %s20, 0
        %s225 = scalar_select %p224, %s20, 0
        %s226 = smul.addr %s223, 3
        %s227 = sadd.s32 %s225, %s226
        %s228 = smul.addr %s227, 2
        %s229 = scalar_lea.vmem %s3, %s228
        %v230 = vld [vmem:[%s221] sm:$0x3]
        %s231 = scalar_lea.vmem %s221, 2
        %v232 = vld [vmem:[%s231] sm:$0x3]
        %s233 = scalar_lea.vmem %s221, 4
        %v234 = vld [vmem:[%s233] sm:$0x3]
        %v235 = vld [vmem:[%s213] sm:$0x1]
        %s236 = sld [smem:[#allocation2 + $0x2]]
        %s237 = ssub.f32 1.0, %s236
        %v238 = vmul.f32 %v230, 0.2989
        %v239 = vmul.f32 %v232, 0.587
        %v240 = vadd.f32 %v238, %v239
        %v241 = vmul.f32 %v234, 0.114
        %v242 = vadd.f32 %v240, %v241
        %v243 = vstv %s237
        %v244 = vmul.f32 %v243, %v242
        %v245 = vstv %s236
        %v246 = vmul.f32 %v245, %v230
        %v247 = vadd.f32 %v246, %v244
        %v248 = vmax.f32 %v247, 0.0
        %v249 = vmin.f32 %v248, 1.0
        %v250 = vmul.f32 %v245, %v232
        %v251 = vadd.f32 %v250, %v244
        %v252 = vmax.f32 %v251, 0.0
        %v253 = vmin.f32 %v252, 1.0
        %v254 = vmul.f32 %v245, %v234
        %v255 = vadd.f32 %v254, %v244
        %v256 = vmax.f32 %v255, 0.0
        %v257 = vmin.f32 %v256, 1.0
        %s258 = sld [smem:[#allocation2 + $0x3]]
        %v259 = vmax.f32 %v249, %v253
        %v260 = vmax.f32 %v259, %v257
        %v261 = vmin.f32 %v249, %v253
        %v262 = vmin.f32 %v261, %v257
        %vm263 = vcmp.eq.f32.partialorder %v260, %v262
        %v264 = vsub.f32 %v260, %v262
        %v265 = vsel %vm263, 1.0, %v264
        %v266 = vrcp.pop %v265
        %v267 = vsel %vm263, 1.0, %v260
        %v268 = vrcp.pop %v267
        %v269 = vmul.f32 %v264, %v268
        %v270 = vsub.f32 %v260, %v249
        %v271 = vmul.f32 %v270, %v266
        %v272 = vsub.f32 %v260, %v253
        %v273 = vmul.f32 %v272, %v266
        %v274 = vsub.f32 %v260, %v257
        %v275 = vmul.f32 %v274, %v266
        %vm276 = vcmp.eq.f32.partialorder %v260, %v249
        %vm277 = vcmp.eq.f32.partialorder %v260, %v253
        %v278 = vsub.f32 %v275, %v273
        %v279 = vadd.f32 %v271, 2.0
        %v280 = vsub.f32 %v279, %v275
        %v281 = vadd.f32 %v273, 4.0
        %v282 = vsub.f32 %v281, %v271
        %v283 = vsel %vm277, %v280, %v282
        %v284 = vsel %vm276, %v278, %v283
        %v285 = vmul.f32 %v284, 0.16666667
        %s286 = sadd.f32 %s258, 1.0
        %v287 = vstv %s286
        %v288 = vadd.f32 %v285, %v287
        %v289 = vfloor.f32 %v288
        %v290 = vsub.f32 %v288, %v289
        %v291 = vmul.f32 %v290, 6.0
        %v292 = vfloor.f32 %v291
        %v293 = vsub.f32 %v291, %v292
        %v294 = vmin.f32 %v292, 5.0
        %v295 = vsub.f32 1.0, %v269
        %v296 = vmul.f32 %v260, %v295
        %v297 = vmax.f32 %v296, 0.0
        %v298 = vmin.f32 %v297, 1.0
        %v299 = vmul.f32 %v269, %v293
        %v300 = vsub.f32 1.0, %v299
        %v301 = vmul.f32 %v260, %v300
        %v302 = vmax.f32 %v301, 0.0
        %v303 = vmin.f32 %v302, 1.0
        %v304 = vsub.f32 1.0, %v293
        %v305 = vmul.f32 %v269, %v304
        %v306 = vsub.f32 1.0, %v305
        %v307 = vmul.f32 %v260, %v306
        %v308 = vmax.f32 %v307, 0.0
        %v309 = vmin.f32 %v308, 1.0
        %vm310 = vcmp.eq.f32.partialorder %v294, 0.0
        %vm311 = vcmp.eq.f32.partialorder %v294, 1.0
        %vm312 = vcmp.eq.f32.partialorder %v294, 2.0
        %vm313 = vcmp.eq.f32.partialorder %v294, 3.0
        %vm314 = vcmp.eq.f32.partialorder %v294, 4.0
        %v315 = vsel %vm314, %v309, %v260
        %v316 = vsel %vm313, %v298, %v315
        %v317 = vsel %vm312, %v298, %v316
        %v318 = vsel %vm311, %v303, %v317
        %v319 = vsel %vm310, %v260, %v318
        %v320 = vsel %vm313, %v303, %v298
        %v321 = vsel %vm312, %v260, %v320
        %v322 = vsel %vm311, %v260, %v321
        %v323 = vsel %vm310, %v309, %v322
        %v324 = vsel %vm314, %v260, %v303
        %v325 = vsel %vm313, %v260, %v324
        %v326 = vsel %vm312, %v309, %v325
        %v327 = vsel %vm311, %v298, %v326
        %v328 = vsel %vm310, %v298, %v327
        %s329 = sld [smem:[#allocation2 + $0x1]]
        %s330 = ssub.f32 1.0, %s329
        %v331 = vstv %s330
        %v332 = vmul.f32 %v331, %v235
        %v333 = vstv %s329
        %v334 = vmul.f32 %v333, %v319
        %v336 = vlaneseq
        %v337 = vshrl.u32 %v336, 7
        %v338 = vsub.s32 0, %v337
        %v339 = vrot.slane %v332, %v338
        %340 = vset.pattern.permute.xlu0 0
        %341 = vperm.xlu0 %340, %v339
        %v342 = vpop.permute.xlu0 %341
        %v344 = vadd.f32 %v334, %v342
        %v345 = vmax.f32 %v344, 0.0
        %v346 = vmin.f32 %v345, 1.0
        %v347 = vmul.f32 %v333, %v323
        %v348 = vadd.f32 %v347, %v342
        %v349 = vmax.f32 %v348, 0.0
        %v350 = vmin.f32 %v349, 1.0
        %v351 = vmul.f32 %v333, %v328
        %v352 = vadd.f32 %v351, %v342
        %v353 = vmax.f32 %v352, 0.0
        %v354 = vmin.f32 %v353, 1.0
        %s355 = sld [smem:[#allocation2]]
        %v356 = vstv %s355
        %v357 = vmul.f32 %v346, %v356
        %v358 = vmax.f32 %v357, 0.0
        %v359 = vmin.f32 %v358, 1.0
        %v360 = vmul.f32 %v350, %v356
        %v361 = vmax.f32 %v360, 0.0
        %v362 = vmin.f32 %v361, 1.0
        %v363 = vmul.f32 %v354, %v356
        %v364 = vmax.f32 %v363, 0.0
        %v365 = vmin.f32 %v364, 1.0
        %366 = vst [vmem:[%s229] sm:$0x3] %v359
        %s367 = scalar_lea.vmem %s229, 2
        %368 = vst [vmem:[%s367] sm:$0x3] %v362
        %s369 = scalar_lea.vmem %s229, 4
        %370 = vst [vmem:[%s369] sm:$0x3] %v365
        %p371 = scmp.lt.s32.totalorder %s19, 1
        %s372 = scalar_select %p371, %s19, 1
        %p373 = scmp.lt.s32.totalorder %s20, 0
        %s374 = scalar_select %p373, %s20, 0
        %s375 = smul.addr %s372, 3
        %s376 = sadd.s32 %s374, %s375
        %s377 = smul.addr %s376, 2
        %s378 = scalar_lea.vmem %s3, %s377
        // Predicated region
        $region37: #{fn.3} parent=31 // pred_check
          %p379 = pneg %p122
        $region38: #{fn.3} parent=31 // pred_check_branch
          %381 = sbr.rel (%p379) target = $region40
        $region39: #{fn.3} parent=31 // pred_region
          _
        $region40: #{fn.3} parent=31 // pred_fallthru
          _
      $region32: #{fn.3} parent=5 // pred_fallthru
        _
      %p382 = scmp.le.s32.totalorder 2, %s10
      // Predicated region
      $region41: #{fn.3} parent=5 // pred_check
        %p383 = pneg %p382
      $region42: #{fn.3} parent=5 // pred_check_branch
        %385 = sbr.rel (%p383) target = $region44
      $region43: #{fn.3} parent=5 // pred_region
        %s386 = ssub.s32 %s10, 2
        // Predicated region
        $region45: #{fn.3} parent=43 // pred_check
          %p387 = pneg %p128
        $region46: #{fn.3} parent=43 // pred_check_branch
          %389 = sbr.rel (%p387) target = $region48
        $region47: #{fn.3} parent=43 // pred_region
          %p390 = scmp.lt.s32.totalorder %s21, 1
          %s391 = scalar_select %p390, %s21, 1
          %p392 = scmp.lt.s32.totalorder %s22, 0
          %s393 = scalar_select %p392, %s22, 0
          %s394 = smul.addr %s391, 3
          %s395 = sadd.s32 %s393, %s394
          %s396 = smul.addr %s395, 2
          %s397 = scalar_lea.vmem %s3, %s396
        $region48: #{fn.3} parent=43 // pred_fallthru
          _
      $region44: #{fn.3} parent=5 // pred_fallthru
        _
    $region6: #{fn.3} parent=1 // loop_footer
      %s14 = sadd.s32 1, %s10
    $region7: #{fn.3} parent=1 // loop_footer_branch
      %9 = sbr.rel target = $region3
    $region8: #{fn.3} parent=1 // loop_exit
      _
    %398 = vsyncpa [#allocation3], 1
    %s399 = scalar_lea.sflag [#allocation3], 1
    %400 = vsyncpa %s399, 1

</llo_original>
